<compile_context>
chip_gen: v5e
topology: v5e:2x2
jax: 0.10.0
libtpu: 0.0.40
codegen_flags: <defaults>
</compile_context>

<pallas_src>
import functools

import jax
import jax.numpy as jnp
from jax.experimental import pallas as pl
from jax.experimental.pallas import tpu as pltpu


def _round_up(x: int, m: int) -> int:
    return ((x + m - 1) // m) * m


def _vmem_capacity_bytes() -> int:
    try:
        return int(getattr(pltpu.get_tpu_info(), "vmem_capacity_bytes",
                           64 * 1024 * 1024))
    except Exception:
        return 64 * 1024 * 1024   # conservative (v7x) fallback


# ----------------------------------------------------------------------------
# RBF-MMD tile kernel: one upper-triangular (tm, tn) tile per grid step
# ----------------------------------------------------------------------------
def _mmd_rbf_tile_kernel(rows_ref, cols_ref, scales_ref,   # scalar prefetch (SMEM i32)
                         nib_ref,                           # SMEM f32 (kernel_num,)  -1/bw_k
                         row_ref, col_ref,                  # VMEM (tm,d)/(tn,d) mxu_dtype
                         rsq_r_ref, rsq_c_ref,              # VMEM (tm,1)/(1,tn) f32 norms
                         w_r_ref, w_c_ref,                  # VMEM (tm,1)/(1,tn) f32 weights
                         out_ref,                           # VMEM (1,1,tn) f32 accumulator
                         *, tm, tn, kernel_num, exp_dtype):
    g = pl.program_id(0)
    p = pl.program_id(1)
    row_t = rows_ref[g, p]
    col_t = cols_ref[g, p]
    scale = scales_ref[g, p]   # 0 = load-balance padding, 1 = diagonal, 2 = off-diagonal

    # i-major schedule: the first pair of every row-tile run is its diagonal
    # pair (scale == 1) -> initialize that row tile's accumulator there.
    @pl.when(scale == 1)
    def _init():
        out_ref[...] = jnp.zeros_like(out_ref)

    @pl.when(scale > 0)          # skip load-balancing padding pairs entirely
    def _compute():
        # MXU gram, contracting the feature dim of BOTH operands (no transpose
        # materialized); operands are already in mxu_dtype, f32 accumulation.
        gram = jax.lax.dot_general(
            row_ref[...], col_ref[...],
            dimension_numbers=(((1,), (1,)), ((), ())),
            preferred_element_type=jnp.float32)                     # (tm, tn)

        # ||x - y||^2 from precomputed norms; clamp low-precision cancellation.
        l2 = jnp.maximum(rsq_r_ref[...] + rsq_c_ref[...] - 2.0 * gram, 0.0)

        # On diagonal tiles the true diagonal is exactly 0; force it so bf16
        # gram cancellation cannot bias the XX / YY terms.
        ri = jax.lax.broadcasted_iota(jnp.int32, (tm, tn), 0)
        ci = jax.lax.broadcasted_iota(jnp.int32, (tm, tn), 1)
        l2 = jnp.where(jnp.logical_and(row_t == col_t, ri == ci), 0.0, l2)

        # Multi-bandwidth Gaussian kernel sum.  exp in exp_dtype (bf16 on the
        # v6e/v7x EUP), accumulation in f32; -1/bw_k are hoisted SMEM scalars.
        l2e = l2.astype(exp_dtype)
        ksum = jnp.zeros((tm, tn), jnp.float32)
        for k in range(kernel_num):
            ksum = ksum + jnp.exp(
                l2e * nib_ref[k].astype(exp_dtype)).astype(jnp.float32)

        # Signed rank-1 weighting (collapses XX + YY - XY - YX); column weight
        # is applied AFTER the row reduction (one fewer (tm,tn) multiply).
        srow = jnp.sum(w_r_ref[...] * ksum, axis=0, keepdims=True)   # (1, tn)
        contrib = (scale.astype(jnp.float32) * w_c_ref[...]) * srow  # (1, tn)
        out_ref[...] += contrib[None]


# ----------------------------------------------------------------------------
# Triangular, megacore-balanced tile schedule (static Python, shape-dependent)
# ----------------------------------------------------------------------------
def _build_pair_schedule(n_i: int, n_groups: int):
    # Row tile i owns (n_i - i) upper-triangular pairs; greedily balance rows
    # across groups (cores), keeping each row's pairs contiguous and i-major.
    group_rows = [[] for _ in range(n_groups)]
    load = [0] * n_groups
    for i in range(n_i):                        # descending workload order
        gsel = min(range(n_groups), key=lambda k: load[k])
        group_rows[gsel].append(i)
        load[gsel] += n_i - i
    group_pairs = [[(i, j) for i in rows for j in range(i, n_i)]
                   for rows in group_rows]
    max_pairs = max(len(p) for p in group_pairs)

    rows, cols, scales = [], [], []
    for pairs in group_pairs:
        r = [i for i, _ in pairs]
        c = [j for _, j in pairs]
        s = [1 if i == j else 2 for i, j in pairs]     # symmetric x2 off-diag
        pad = max_pairs - len(pairs)
        # Padding pairs repeat the group's last (diagonal-owned) tile with
        # scale 0: no init, no contribution, no block-index change -> no DMA.
        r += [pairs[-1][0]] * pad
        c += [pairs[-1][1]] * pad
        s += [0] * pad
        rows.append(r), cols.append(c), scales.append(s)
    as_i32 = lambda x: jnp.asarray(x, dtype=jnp.int32)
    return as_i32(rows), as_i32(cols), as_i32(scales), max_pairs


# ----------------------------------------------------------------------------
# RBF-MMD wrapper
# ----------------------------------------------------------------------------
def _mmd_rbf(source, target, *, kernel_mul, kernel_num, fix_sigma,
             mxu_dtype, exp_dtype, tile):
    b_src, d = source.shape
    b_tgt, d_t = target.shape
    if d != d_t:
        raise ValueError("source/target feature dims must match")
    n = b_src + b_tgt

    total = jnp.concatenate(
        [source.astype(jnp.float32), target.astype(jnp.float32)], axis=0)

    # ---- cheap O(N*D) prologue: analytic bandwidth on CENTERED data ----
    # sum_ij ||x_i - x_j||^2 = 2*N*sum_i ||x_i - mean||^2  (translation
    # invariant -> no large-value cancellation).
    # TODO(synk): prologue stays in plain JAX (O(N*D), ~1/N of the kernel
    # work); fold into a Pallas row-reduction pass if it ever matters.
    if fix_sigma is not None:
        bandwidth = jnp.asarray(fix_sigma, dtype=jnp.float32)
    else:
        centered = total - jnp.mean(total, axis=0, keepdims=True)
        sum_l2 = 2.0 * n * jnp.sum(centered * centered)
        bandwidth = sum_l2 / float(n * n - n)
    bandwidth = bandwidth / (kernel_mul ** (kernel_num // 2))
    bw = bandwidth * (kernel_mul ** jnp.arange(kernel_num, dtype=jnp.float32))
    neg_inv_bw = (-1.0 / bw).astype(jnp.float32)                # (kernel_num,)

    # ---- precomputed per-row squared norms and signed weights ----
    rsq = jnp.sum(total * total, axis=1)                        # (n,) f32
    w = jnp.concatenate(
        [jnp.full((b_src,), 1.0 / b_src, jnp.float32),
         jnp.full((b_tgt,), -1.0 / b_tgt, jnp.float32)])        # (n,) f32

    # ---- VMEM-aware tile sizing (128-aligned for the MXU / lane layout) ----
    d_pad = _round_up(max(d, 128), 128)
    mxu_itemsize = jnp.zeros((), mxu_dtype).dtype.itemsize
    vmem_cap = _vmem_capacity_bytes()                 # 64 MiB v7x, 128 MiB v5e/v6e
    vmem_limit = min(vmem_cap * 3 // 4, 112 * 1024 * 1024)

    def _est(t):   # rough per-step VMEM footprint
        return (2 * 2 * t * d_pad * mxu_itemsize      # row+col tiles, dbl-buffered
                + 6 * t * t * 4                       # gram / l2 / ksum temporaries
                + 2 * 4 * 2 * t * 4                   # norm/weight blocks
                + 2 * t * 4)                          # output block

    tm = max(128, min(_round_up(tile, 128), _round_up(n, 128)))
    while tm > 128 and _est(tm) > vmem_limit * 6 // 10:
        tm -= 128
    tn = tm                                            # square tiles: x2 symmetry valid
    n_pad = _round_up(n, tm)

    # ---- pad + cast once in the wrapper (bf16 HBM stream by default) ----
    total_pad = jnp.pad(total, ((0, n_pad - n), (0, d_pad - d))).astype(mxu_dtype)
    rsq_pad = jnp.pad(rsq, (0, n_pad - n))
    w_pad = jnp.pad(w, (0, n_pad - n))                 # padding rows: weight 0 -> exact
    rsq_r, rsq_c = rsq_pad.reshape(n_pad, 1), rsq_pad.reshape(1, n_pad)
    w_r, w_c = w_pad.reshape(n_pad, 1), w_pad.reshape(1, n_pad)

    n_i = n_pad // tm
    n_groups = 2 if n_i >= 2 else 1                    # megacore balance (v7x)
    rows_i, cols_i, scales_i, max_pairs = _build_pair_schedule(n_i, n_groups)

    kernel = functools.partial(
        _mmd_rbf_tile_kernel, tm=tm, tn=tn,
        kernel_num=kernel_num, exp_dtype=exp_dtype)

    grid_spec = pltpu.PrefetchScalarGridSpec(
        num_scalar_prefetch=3,                          # rows, cols, scales
        grid=(n_groups, max_pairs),
        in_specs=[
            pl.BlockSpec(memory_space=pltpu.MemorySpace.SMEM),               # -1/bw_k
            pl.BlockSpec((tm, d_pad), lambda g, p, r, c, s: (r[g, p], 0)),   # row tile
            pl.BlockSpec((tn, d_pad), lambda g, p, r, c, s: (c[g, p], 0)),   # col tile
            pl.BlockSpec((tm, 1),     lambda g, p, r, c, s: (r[g, p], 0)),   # row norms
            pl.BlockSpec((1, tn),     lambda g, p, r, c, s: (0, c[g, p])),   # col norms
            pl.BlockSpec((tm, 1),     lambda g, p, r, c, s: (r[g, p], 0)),   # row weights
            pl.BlockSpec((1, tn),     lambda g, p, r, c, s: (0, c[g, p])),   # col weights
        ],
        out_specs=pl.BlockSpec((1, 1, tn), lambda g, p, r, c, s: (r[g, p], 0, 0)),
    )

    partials = pl.pallas_call(
        kernel,
        out_shape=jax.ShapeDtypeStruct((n_i, 1, tn), jnp.float32),
        grid_spec=grid_spec,
        compiler_params=pltpu.CompilerParams(
            dimension_semantics=("parallel", "arbitrary"),
            vmem_limit_bytes=vmem_limit,
        ),
    )(rows_i, cols_i, scales_i,                 # scalar prefetch
      neg_inv_bw, total_pad, total_pad, rsq_r, rsq_c, w_r, w_c)

    # Tiny final combine of the per-row-tile partial accumulators.
    return jnp.sum(partials)


# ----------------------------------------------------------------------------
# Linear MMD: ||mean(X) - mean(Y)||^2  (O(B*D), single grid point)
# ----------------------------------------------------------------------------
# TODO(synk): tile this as a row-reduction for very large batch/feature dims;
# the whole-array VMEM version is fine for typical embedding-sized inputs.
def _mmd_linear_kernel(src_ref, tgt_ref, out_ref):
    delta = (jnp.mean(src_ref[...].astype(jnp.float32), axis=0)
             - jnp.mean(tgt_ref[...].astype(jnp.float32), axis=0))
    out_ref[0, 0] = jnp.sum(delta * delta)


def _mmd_linear(source, target):
    out = pl.pallas_call(
        _mmd_linear_kernel,
        out_shape=jax.ShapeDtypeStruct((1, 1), jnp.float32),
        in_specs=[
            pl.BlockSpec(memory_space=pltpu.MemorySpace.VMEM),
            pl.BlockSpec(memory_space=pltpu.MemorySpace.VMEM),
        ],
        out_specs=pl.BlockSpec(memory_space=pltpu.MemorySpace.SMEM),
    )(source, target)
    return out[0, 0]


# ----------------------------------------------------------------------------
# Public wrapper (equivalent of MMD_loss.forward)
# ----------------------------------------------------------------------------
def mmd_loss(source, target, *, kernel_type="rbf", kernel_mul=2.0,
             kernel_num=5, fix_sigma=None, mxu_dtype=jnp.bfloat16,
             exp_dtype=None, tile=512):
    """exp_dtype defaults to mxu_dtype (bf16 EUP on v6e/v7x); pass
    exp_dtype=jnp.float32 on v5e (no bf16 EUP) or for bit-tight results."""
    if kernel_type == "linear":
        return _mmd_linear(source, target)
    if kernel_type == "rbf":
        if exp_dtype is None:
            exp_dtype = mxu_dtype
        return _mmd_rbf(source, target, kernel_mul=kernel_mul,
                        kernel_num=kernel_num, fix_sigma=fix_sigma,
                        mxu_dtype=mxu_dtype, exp_dtype=exp_dtype, tile=tile)
    raise ValueError(f"unknown kernel_type {kernel_type!r}")


# ----------------------------------------------------------------------------
# Pure-JAX reference (mirrors the PyTorch code literally)
# ----------------------------------------------------------------------------
def _mmd_rbf_ref(source, target, kernel_mul=2.0, kernel_num=5):
    b = source.shape[0]
    total = jnp.concatenate([source, target], axis=0).astype(jnp.float32)
    n = total.shape[0]
    diff = total[None, :, :] - total[:, None, :]
    l2 = jnp.sum(diff * diff, axis=2)
    bandwidth = jnp.sum(l2) / (n * n - n)
    bandwidth = bandwidth / (kernel_mul ** (kernel_num // 2))
    kernels = sum(jnp.exp(-l2 / (bandwidth * kernel_mul ** i))
                  for i in range(kernel_num))
    xx = jnp.mean(kernels[:b, :b])
    yy = jnp.mean(kernels[b:, b:])
    xy = jnp.mean(kernels[:b, b:])
    yx = jnp.mean(kernels[b:, :b])
    return xx + yy - xy - yx


if __name__ == "__main__":
    key = jax.random.PRNGKey(0)
    k_src, k_tgt = jax.random.split(key)

    # Small single-tile shapes (8 samples per domain, 32-dim features).
    B, D = 8, 32
    source = jax.random.normal(k_src, (B, D), dtype=jnp.float32)
    target = jax.random.normal(k_tgt, (B, D), dtype=jnp.float32) + 0.5
    ref = _mmd_rbf_ref(source, target)

    # Default path: bf16 MXU + bf16 exp -> loose tolerance.
    loss_bf16 = jax.block_until_ready(mmd_loss(source, target, kernel_type="rbf"))
    assert jnp.allclose(loss_bf16, ref, rtol=1e-1, atol=1e-1), (loss_bf16, ref)

    # Full-precision path -> tight tolerance.
    loss_f32 = jax.block_until_ready(
        mmd_loss(source, target, kernel_type="rbf", mxu_dtype=jnp.float32))
    assert jnp.allclose(loss_f32, ref, rtol=1e-3, atol=1e-3), (loss_f32, ref)

    # Multi-tile shapes: 320 stacked rows with tile=128 -> 3x3 tile grid,
    # 6 triangular pairs split across 2 balanced groups; exercises the
    # scalar-prefetch schedule, accumulation runs, x2 doubling and padding.
    B2 = 160
    src2 = jax.random.normal(k_src, (B2, D), dtype=jnp.float32)
    tgt2 = jax.random.normal(k_tgt, (B2, D), dtype=jnp.float32) + 0.5
    ref2 = _mmd_rbf_ref(src2, tgt2)
    loss2_f32 = jax.block_until_ready(
        mmd_loss(src2, tgt2, kernel_type="rbf", mxu_dtype=jnp.float32, tile=128))
    assert jnp.allclose(loss2_f32, ref2, rtol=1e-3, atol=1e-3), (loss2_f32, ref2)
    loss2_bf16 = jax.block_until_ready(
        mmd_loss(src2, tgt2, kernel_type="rbf", tile=128))
    assert jnp.allclose(loss2_bf16, ref2, rtol=1e-1, atol=1e-1), (loss2_bf16, ref2)

    # Linear branch of forward().
    lin = jax.block_until_ready(mmd_loss(source, target, kernel_type="linear"))
    delta = jnp.mean(source, 0) - jnp.mean(target, 0)
    assert jnp.allclose(lin, jnp.dot(delta, delta), rtol=1e-5, atol=1e-5), lin

    print("KERNEL_OK")
</pallas_src>

<mosaic_0001>
module attributes {stable_mosaic.version = 11 : i64} {
  func.func @_mmd_rbf_tile_kernel(%arg0: i32, %arg1: i32, %arg2: memref<1x1xi32, #tpu.memory_space<smem>>, %arg3: memref<1x1xi32, #tpu.memory_space<smem>>, %arg4: memref<1x1xi32, #tpu.memory_space<smem>>, %arg5: memref<5xf32, #tpu.memory_space<smem>>, %arg6: memref<128x128xbf16, #tpu.memory_space<vmem>>, %arg7: memref<128x128xbf16, #tpu.memory_space<vmem>>, %arg8: memref<128x1xf32, #tpu.memory_space<vmem>>, %arg9: memref<1x128xf32, #tpu.memory_space<vmem>>, %arg10: memref<128x1xf32, #tpu.memory_space<vmem>>, %arg11: memref<1x128xf32, #tpu.memory_space<vmem>>, %arg12: memref<1x1x128xf32, #tpu.memory_space<vmem>>) attributes {dimension_semantics = [#tpu.dimension_semantics<parallel>, #tpu.dimension_semantics<arbitrary>], iteration_bounds = array<i64: 1, 1>, scalar_prefetch = 3 : i64, scratch_operands = 0 : i64, tpu.core_type = #tpu.core_type<tc>, window_params = [{transform_indices = @transform_0, window_bounds = array<i64: 5>}, {transform_indices = @transform_1, window_bounds = array<i64: 128, 128>}, {transform_indices = @transform_2, window_bounds = array<i64: 128, 128>}, {transform_indices = @transform_3, window_bounds = array<i64: 128, 1>}, {transform_indices = @transform_4, window_bounds = array<i64: 1, 128>}, {transform_indices = @transform_5, window_bounds = array<i64: 128, 1>}, {transform_indices = @transform_6, window_bounds = array<i64: 1, 128>}, {transform_indices = @transform_7, window_bounds = array<i64: 1, 1, 128>}]} {
    %0 = arith.index_cast %arg0 : i32 to index
    %1 = arith.index_cast %arg1 : i32 to index
    %2 = memref.load %arg2[%0, %1] : memref<1x1xi32, #tpu.memory_space<smem>>
    %3 = arith.index_cast %arg0 : i32 to index
    %4 = arith.index_cast %arg1 : i32 to index
    %5 = memref.load %arg3[%3, %4] : memref<1x1xi32, #tpu.memory_space<smem>>
    %6 = arith.index_cast %arg0 : i32 to index
    %7 = arith.index_cast %arg1 : i32 to index
    %8 = memref.load %arg4[%6, %7] : memref<1x1xi32, #tpu.memory_space<smem>>
    %c1_i32 = arith.constant 1 : i32
    %9 = arith.cmpi eq, %8, %c1_i32 : i32
    %10 = arith.extui %9 : i1 to i32
    %c0_i32 = arith.constant 0 : i32
    %11 = arith.cmpi ne, %10, %c0_i32 : i32
    scf.if %11 {
      %cst = arith.constant 0.000000e+00 : f32
      %15 = vector.broadcast %cst : f32 to vector<1x1x128xf32>
      %c0 = arith.constant 0 : index
      %c0_2 = arith.constant 0 : index
      %c0_3 = arith.constant 0 : index
      %16 = vector.load %arg12[%c0, %c0_2, %c0_3] : memref<1x1x128xf32, #tpu.memory_space<vmem>>, vector<1x1x128xf32>
      tpu.vector_store %arg12[%c0, %c0_2, %c0_3], %15 {strides = array<i32>} : memref<1x1x128xf32, #tpu.memory_space<vmem>>, vector<1x1x128xf32>,
    } else {
    }
    %c0_i32_0 = arith.constant 0 : i32
    %12 = arith.cmpi sgt, %8, %c0_i32_0 : i32
    %13 = arith.extui %12 : i1 to i32
    %c0_i32_1 = arith.constant 0 : i32
    %14 = arith.cmpi ne, %13, %c0_i32_1 : i32
    scf.if %14 {
      %c0 = arith.constant 0 : index
      %c0_2 = arith.constant 0 : index
      %15 = vector.load %arg6[%c0, %c0_2] : memref<128x128xbf16, #tpu.memory_space<vmem>>, vector<128x128xbf16>
      %c0_3 = arith.constant 0 : index
      %c0_4 = arith.constant 0 : index
      %16 = vector.load %arg7[%c0_3, %c0_4] : memref<128x128xbf16, #tpu.memory_space<vmem>>, vector<128x128xbf16>
      %cst = arith.constant dense<0.000000e+00> : vector<128x128xf32>
      %17 = tpu.matmul %15, %16, %cst {dimension_numbers = #tpu.dot_dimension_numbers<[1], [1], [0], [0], [0, 0, 1, 0], [], []>} : vector<128x128xbf16>, vector<128x128xbf16>, vector<128x128xf32> -> vector<128x128xf32>
      %c0_5 = arith.constant 0 : index
      %c0_6 = arith.constant 0 : index
      %18 = vector.load %arg8[%c0_5, %c0_6] : memref<128x1xf32, #tpu.memory_space<vmem>>, vector<128x1xf32>
      %c0_7 = arith.constant 0 : index
      %c0_8 = arith.constant 0 : index
      %19 = vector.load %arg9[%c0_7, %c0_8] : memref<1x128xf32, #tpu.memory_space<vmem>>, vector<1x128xf32>
      %20 = vector.broadcast %18 : vector<128x1xf32> to vector<128x128xf32>
      %21 = vector.broadcast %19 : vector<1x128xf32> to vector<128x128xf32>
      %22 = arith.addf %20, %21 : vector<128x128xf32>
      %cst_9 = arith.constant 2.000000e+00 : f32
      %23 = vector.broadcast %cst_9 : f32 to vector<128x128xf32>
      %24 = arith.mulf %23, %17 : vector<128x128xf32>
      %25 = arith.subf %22, %24 : vector<128x128xf32>
      %cst_10 = arith.constant 0.000000e+00 : f32
      %26 = vector.broadcast %cst_10 : f32 to vector<128x128xf32>
      %27 = arith.maximumf %25, %26 : vector<128x128xf32>
      %28 = tpu.iota {dimensions = array<i32: 0>} : vector<128x128xi32>
      %29 = tpu.iota {dimensions = array<i32: 1>} : vector<128x128xi32>
      %30 = arith.cmpi eq, %2, %5 : i32
      %31 = arith.cmpi eq, %28, %29 : vector<128x128xi32>
      %32 = vector.broadcast %30 : i1 to vector<128x128xi1>
      %33 = arith.andi %32, %31 : vector<128x128xi1>
      %cst_11 = arith.constant 0.000000e+00 : f32
      %34 = vector.broadcast %cst_11 : f32 to vector<128x128xf32>
      %35 = arith.select %33, %34, %27 : vector<128x128xi1>, vector<128x128xf32>
      %36 = arith.truncf %35 : vector<128x128xf32> to vector<128x128xbf16>
      %cst_12 = arith.constant 0.000000e+00 : f32
      %37 = vector.broadcast %cst_12 : f32 to vector<128x128xf32>
      %c0_13 = arith.constant 0 : index
      %38 = memref.load %arg5[%c0_13] : memref<5xf32, #tpu.memory_space<smem>>
      %39 = arith.truncf %38 : f32 to bf16
      %40 = vector.broadcast %39 : bf16 to vector<128x128xbf16>
      %41 = arith.mulf %36, %40 : vector<128x128xbf16>
      %42 = math.exp %41 : vector<128x128xbf16>
      %43 = arith.extf %42 : vector<128x128xbf16> to vector<128x128xf32>
      %44 = arith.addf %37, %43 : vector<128x128xf32>
      %c1 = arith.constant 1 : index
      %45 = memref.load %arg5[%c1] : memref<5xf32, #tpu.memory_space<smem>>
      %46 = arith.truncf %45 : f32 to bf16
      %47 = vector.broadcast %46 : bf16 to vector<128x128xbf16>
      %48 = arith.mulf %36, %47 : vector<128x128xbf16>
      %49 = math.exp %48 : vector<128x128xbf16>
      %50 = arith.extf %49 : vector<128x128xbf16> to vector<128x128xf32>
      %51 = arith.addf %44, %50 : vector<128x128xf32>
      %c2 = arith.constant 2 : index
      %52 = memref.load %arg5[%c2] : memref<5xf32, #tpu.memory_space<smem>>
      %53 = arith.truncf %52 : f32 to bf16
      %54 = vector.broadcast %53 : bf16 to vector<128x128xbf16>
      %55 = arith.mulf %36, %54 : vector<128x128xbf16>
      %56 = math.exp %55 : vector<128x128xbf16>
      %57 = arith.extf %56 : vector<128x128xbf16> to vector<128x128xf32>
      %58 = arith.addf %51, %57 : vector<128x128xf32>
      %c3 = arith.constant 3 : index
      %59 = memref.load %arg5[%c3] : memref<5xf32, #tpu.memory_space<smem>>
      %60 = arith.truncf %59 : f32 to bf16
      %61 = vector.broadcast %60 : bf16 to vector<128x128xbf16>
      %62 = arith.mulf %36, %61 : vector<128x128xbf16>
      %63 = math.exp %62 : vector<128x128xbf16>
      %64 = arith.extf %63 : vector<128x128xbf16> to vector<128x128xf32>
      %65 = arith.addf %58, %64 : vector<128x128xf32>
      %c4 = arith.constant 4 : index
      %66 = memref.load %arg5[%c4] : memref<5xf32, #tpu.memory_space<smem>>
      %67 = arith.truncf %66 : f32 to bf16
      %68 = vector.broadcast %67 : bf16 to vector<128x128xbf16>
      %69 = arith.mulf %36, %68 : vector<128x128xbf16>
      %70 = math.exp %69 : vector<128x128xbf16>
      %71 = arith.extf %70 : vector<128x128xbf16> to vector<128x128xf32>
      %72 = arith.addf %65, %71 : vector<128x128xf32>
      %c0_14 = arith.constant 0 : index
      %c0_15 = arith.constant 0 : index
      %73 = vector.load %arg10[%c0_14, %c0_15] : memref<128x1xf32, #tpu.memory_space<vmem>>, vector<128x1xf32>
      %74 = vector.broadcast %73 : vector<128x1xf32> to vector<128x128xf32>
      %75 = arith.mulf %74, %72 : vector<128x128xf32>
      %cst_16 = arith.constant dense<0.000000e+00> : vector<128xf32>
      %76 = vector.multi_reduction <add>, %75, %cst_16 [0] : vector<128x128xf32> to vector<128xf32>
      %77 = vector.shape_cast %76 : vector<128xf32> to vector<1x128xf32>
      %78 = arith.sitofp %8 : i32 to f32
      %c0_17 = arith.constant 0 : index
      %c0_18 = arith.constant 0 : index
      %79 = vector.load %arg11[%c0_17, %c0_18] : memref<1x128xf32, #tpu.memory_space<vmem>>, vector<1x128xf32>
      %80 = vector.broadcast %78 : f32 to vector<1x128xf32>
      %81 = arith.mulf %80, %79 : vector<1x128xf32>
      %82 = arith.mulf %81, %77 : vector<1x128xf32>
      %c0_19 = arith.constant 0 : index
      %c0_20 = arith.constant 0 : index
      %c0_21 = arith.constant 0 : index
      %83 = vector.load %arg12[%c0_19, %c0_20, %c0_21] : memref<1x1x128xf32, #tpu.memory_space<vmem>>, vector<1x1x128xf32>
      %84 = vector.shape_cast %82 : vector<1x128xf32> to vector<1x1x128xf32>
      %85 = arith.addf %83, %84 : vector<1x1x128xf32>
      %c0_22 = arith.constant 0 : index
      %c0_23 = arith.constant 0 : index
      %c0_24 = arith.constant 0 : index
      %86 = vector.load %arg12[%c0_22, %c0_23, %c0_24] : memref<1x1x128xf32, #tpu.memory_space<vmem>>, vector<1x1x128xf32>
      tpu.vector_store %arg12[%c0_22, %c0_23, %c0_24], %85 {strides = array<i32>} : memref<1x1x128xf32, #tpu.memory_space<vmem>>, vector<1x1x128xf32>,
    } else {
    }
    return
  }
  func.func @transform_0(%arg0: i32, %arg1: i32, %arg2: memref<1x1xi32, #tpu.memory_space<smem>>, %arg3: memref<1x1xi32, #tpu.memory_space<smem>>, %arg4: memref<1x1xi32, #tpu.memory_space<smem>>) -> i32 {
    %c0_i32 = arith.constant 0 : i32
    %c0_i32_0 = arith.constant 0 : i32
    return %c0_i32 : i32
  }
  func.func @transform_1(%arg0: i32, %arg1: i32, %arg2: memref<1x1xi32, #tpu.memory_space<smem>>, %arg3: memref<1x1xi32, #tpu.memory_space<smem>>, %arg4: memref<1x1xi32, #tpu.memory_space<smem>>) -> (i32, i32) {
    %0 = arith.index_cast %arg0 : i32 to index
    %1 = arith.index_cast %arg1 : i32 to index
    %2 = memref.load %arg2[%0, %1] : memref<1x1xi32, #tpu.memory_space<smem>>
    %c0_i32 = arith.constant 0 : i32
    %c0_i32_0 = arith.constant 0 : i32
    return %2, %c0_i32 : i32, i32
  }
  func.func @transform_2(%arg0: i32, %arg1: i32, %arg2: memref<1x1xi32, #tpu.memory_space<smem>>, %arg3: memref<1x1xi32, #tpu.memory_space<smem>>, %arg4: memref<1x1xi32, #tpu.memory_space<smem>>) -> (i32, i32) {
    %0 = arith.index_cast %arg0 : i32 to index
    %1 = arith.index_cast %arg1 : i32 to index
    %2 = memref.load %arg3[%0, %1] : memref<1x1xi32, #tpu.memory_space<smem>>
    %c0_i32 = arith.constant 0 : i32
    %c0_i32_0 = arith.constant 0 : i32
    return %2, %c0_i32 : i32, i32
  }
  func.func @transform_3(%arg0: i32, %arg1: i32, %arg2: memref<1x1xi32, #tpu.memory_space<smem>>, %arg3: memref<1x1xi32, #tpu.memory_space<smem>>, %arg4: memref<1x1xi32, #tpu.memory_space<smem>>) -> (i32, i32) {
    %0 = arith.index_cast %arg0 : i32 to index
    %1 = arith.index_cast %arg1 : i32 to index
    %2 = memref.load %arg2[%0, %1] : memref<1x1xi32, #tpu.memory_space<smem>>
    %c0_i32 = arith.constant 0 : i32
    %c0_i32_0 = arith.constant 0 : i32
    return %2, %c0_i32 : i32, i32
  }
  func.func @transform_4(%arg0: i32, %arg1: i32, %arg2: memref<1x1xi32, #tpu.memory_space<smem>>, %arg3: memref<1x1xi32, #tpu.memory_space<smem>>, %arg4: memref<1x1xi32, #tpu.memory_space<smem>>) -> (i32, i32) {
    %0 = arith.index_cast %arg0 : i32 to index
    %1 = arith.index_cast %arg1 : i32 to index
    %2 = memref.load %arg3[%0, %1] : memref<1x1xi32, #tpu.memory_space<smem>>
    %c0_i32 = arith.constant 0 : i32
    %c0_i32_0 = arith.constant 0 : i32
    return %c0_i32, %2 : i32, i32
  }
  func.func @transform_5(%arg0: i32, %arg1: i32, %arg2: memref<1x1xi32, #tpu.memory_space<smem>>, %arg3: memref<1x1xi32, #tpu.memory_space<smem>>, %arg4: memref<1x1xi32, #tpu.memory_space<smem>>) -> (i32, i32) {
    %0 = arith.index_cast %arg0 : i32 to index
    %1 = arith.index_cast %arg1 : i32 to index
    %2 = memref.load %arg2[%0, %1] : memref<1x1xi32, #tpu.memory_space<smem>>
    %c0_i32 = arith.constant 0 : i32
    %c0_i32_0 = arith.constant 0 : i32
    return %2, %c0_i32 : i32, i32
  }
  func.func @transform_6(%arg0: i32, %arg1: i32, %arg2: memref<1x1xi32, #tpu.memory_space<smem>>, %arg3: memref<1x1xi32, #tpu.memory_space<smem>>, %arg4: memref<1x1xi32, #tpu.memory_space<smem>>) -> (i32, i32) {
    %0 = arith.index_cast %arg0 : i32 to index
    %1 = arith.index_cast %arg1 : i32 to index
    %2 = memref.load %arg3[%0, %1] : memref<1x1xi32, #tpu.memory_space<smem>>
    %c0_i32 = arith.constant 0 : i32
    %c0_i32_0 = arith.constant 0 : i32
    return %c0_i32, %2 : i32, i32
  }
  func.func @transform_7(%arg0: i32, %arg1: i32, %arg2: memref<1x1xi32, #tpu.memory_space<smem>>, %arg3: memref<1x1xi32, #tpu.memory_space<smem>>, %arg4: memref<1x1xi32, #tpu.memory_space<smem>>) -> (i32, i32, i32) {
    %0 = arith.index_cast %arg0 : i32 to index
    %1 = arith.index_cast %arg1 : i32 to index
    %2 = memref.load %arg2[%0, %1] : memref<1x1xi32, #tpu.memory_space<smem>>
    %c0_i32 = arith.constant 0 : i32
    %c0_i32_0 = arith.constant 0 : i32
    %c0_i32_1 = arith.constant 0 : i32
    return %2, %c0_i32, %c0_i32_0 : i32, i32, i32
  }
}

</mosaic_0001>

<llo_original>
// kernel: tpu_custom_call.1
$region0: #{tpu_custom_call.1}
  #allocation0 [shape = 'u32[]', space=smem, size = 0x4, offset = 0x4, fixed_abs, tag = 'smem constant byte address 0x4 - core index']
  #allocation1 [shape = 'u32[72,128]{1,0:T(1,128)}', space=vmem, size = 0x9000, scoped, tag = 'internal scratch']
  #allocation2 [shape = 's32[1]{0}', space=sflag, size = 0x4, scoped, tag = 'scoped memory for tpu_custom_call.1']
  #allocation3 [shape = 's32[1,1]{1,0:T(1,128)S(6)}', space=smem, size = 0x200, scoped, tag = 'prefetched SMEM operand 0']
  #allocation4 [shape = 's32[1,1]{1,0:T(1,128)S(6)}', space=smem, size = 0x200, scoped, tag = 'prefetched SMEM operand 1']
  #allocation5 [shape = 's32[1,1]{1,0:T(1,128)S(6)}', space=smem, size = 0x200, scoped, tag = 'prefetched SMEM operand 2']
  %s0 = inlined_call_operand.<no memory space> [shape: s32[1,1], index: 0, kind: input, shape index: {}]
  %s1 = inlined_call_operand.<no memory space> [shape: s32[1,1], index: 1, kind: input, shape index: {}]
  %s2 = inlined_call_operand.<no memory space> [shape: s32[1,1], index: 2, kind: input, shape index: {}]
  %s3 = inlined_call_operand.vmem [shape: f32[5], index: 3, kind: input, shape index: {}]
  %s4 = inlined_call_operand.vmem [shape: bf16[128,128], index: 4, kind: input, shape index: {}]
  %s5 = inlined_call_operand.vmem [shape: bf16[128,128], index: 5, kind: input, shape index: {}]
  %s6 = inlined_call_operand.vmem [shape: f32[128,1], index: 6, kind: input, shape index: {}]
  %s7 = inlined_call_operand.vmem [shape: f32[1,128], index: 7, kind: input, shape index: {}]
  %s8 = inlined_call_operand.vmem [shape: f32[128,1], index: 8, kind: input, shape index: {}]
  %s9 = inlined_call_operand.vmem [shape: f32[1,128], index: 9, kind: input, shape index: {}]
  %s10 = inlined_call_operand.hbm [shape: f32[1,1,128], index: 10, kind: output, shape index: {}]
  %s11 = sld [smem:[#allocation0]]
  $region50: #{tpu_custom_call.1} parent=0
    _
  %s13 = ssub.s32 1, %s11
  %s14 = scalar_select 0, %s13, %s11
  %15 = sst [smem:[#allocation3]] %s0
  %16 = sst [smem:[#allocation4]] %s1
  %17 = sst [smem:[#allocation5]] %s2
  $region1: #{tpu_custom_call.1} parent=0
    #allocation6 [shape = 'u8[512]{0}', space=smem, size = 0x200, scoped, tag = 'input window, operand 3, single buffered']
    #allocation7 [shape = 's32[1]{0}', space=sflag, size = 0x4, scoped, tag = 'scoped memory for tpu_custom_call.1']
    #allocation8 [shape = 's32[1]{0}', space=sflag, size = 0x4, scoped, tag = 'scoped memory for tpu_custom_call.1']
    #allocation9 [shape = 'u8[512]{0}', space=vmem, size = 0x400, scoped, tag = 'output window, operand 0, single buffered']
    %18 = vsyncpa [#allocation8], 0
    %19 = vsyncpa [#allocation7], 0
    // Predicated region
    $region2: #{tpu_custom_call.1} parent=1 // pred_check
      _
    $region3: #{tpu_custom_call.1} parent=1 // pred_check_branch
      %21 = sbr.rel (0) target = $region5
    $region4: #{tpu_custom_call.1} parent=1 // pred_region
      %23 = vsyncadd [#allocation8], 0
      %s25 = sshll.u32 %s3, 4
      %s26 = int_to_ptr.vmem [resolvable:$true] %s25
      %28 = dma.vmem_to_smem %s26, 16, [#allocation6], [#allocation8]
    $region5: #{tpu_custom_call.1} parent=1 // pred_fallthru
      _
    // Predicated region
    $region6: #{tpu_custom_call.1} parent=1 // pred_check
      _
    $region7: #{tpu_custom_call.1} parent=1 // pred_check_branch
      %30 = sbr.rel (0) target = $region9
    $region8: #{tpu_custom_call.1} parent=1 // pred_region
      %s31 = sadd.s32 0, 0
      %s32 = smul.u32 %s31, 128
      %s33 = sadd.s32 %s32, 0
      %s34 = sld [smem:[#allocation3 + %s33]]
      %s35 = smul.u32 16, %s34
      %p36 = scmp.lt.s32.totalorder %s35, 15
      %s37 = scalar_select %p36, %s35, 15
      %s38 = smul.addr %s37, 4
      %s39 = scalar_lea.vmem %s4, %s38
      %s40 = sadd.s32 0, 0
      %s41 = smul.u32 %s40, 128
      %s42 = sadd.s32 %s41, 0
      %s43 = sld [smem:[#allocation3 + %s42]]
      %s44 = smul.u32 16, %s43
    $region9: #{tpu_custom_call.1} parent=1 // pred_fallthru
      _
    // Predicated region
    $region10: #{tpu_custom_call.1} parent=1 // pred_check
      _
    $region11: #{tpu_custom_call.1} parent=1 // pred_check_branch
      %46 = sbr.rel (0) target = $region13
    $region12: #{tpu_custom_call.1} parent=1 // pred_region
      %s47 = sadd.s32 0, 0
      %s48 = smul.u32 %s47, 128
      %s49 = sadd.s32 %s48, 0
      %s50 = sld [smem:[#allocation4 + %s49]]
      %s51 = smul.u32 16, %s50
      %p52 = scmp.lt.s32.totalorder %s51, 15
      %s53 = scalar_select %p52, %s51, 15
      %s54 = smul.addr %s53, 4
      %s55 = scalar_lea.vmem %s5, %s54
      %s56 = sadd.s32 0, 0
      %s57 = smul.u32 %s56, 128
      %s58 = sadd.s32 %s57, 0
      %s59 = sld [smem:[#allocation4 + %s58]]
      %s60 = smul.u32 16, %s59
    $region13: #{tpu_custom_call.1} parent=1 // pred_fallthru
      _
    // Predicated region
    $region14: #{tpu_custom_call.1} parent=1 // pred_check
      _
    $region15: #{tpu_custom_call.1} parent=1 // pred_check_branch
      %62 = sbr.rel (0) target = $region17
    $region16: #{tpu_custom_call.1} parent=1 // pred_region
      %s63 = sadd.s32 0, 0
      %s64 = smul.u32 %s63, 128
      %s65 = sadd.s32 %s64, 0
      %s66 = sld [smem:[#allocation3 + %s65]]
      %s67 = smul.u32 16, %s66
      %p68 = scmp.lt.s32.totalorder %s67, 15
      %s69 = scalar_select %p68, %s67, 15
      %s70 = smul.addr %s69, 8
      %s71 = scalar_lea.vmem %s6, %s70
      %s72 = sadd.s32 0, 0
      %s73 = smul.u32 %s72, 128
      %s74 = sadd.s32 %s73, 0
      %s75 = sld [smem:[#allocation3 + %s74]]
      %s76 = smul.u32 16, %s75
    $region17: #{tpu_custom_call.1} parent=1 // pred_fallthru
      _
    // Predicated region
    $region18: #{tpu_custom_call.1} parent=1 // pred_check
      _
    $region19: #{tpu_custom_call.1} parent=1 // pred_check_branch
      %78 = sbr.rel (0) target = $region21
    $region20: #{tpu_custom_call.1} parent=1 // pred_region
      %s79 = sadd.s32 0, 0
      %s80 = smul.u32 %s79, 128
      %s81 = sadd.s32 %s80, 0
      %s82 = sld [smem:[#allocation4 + %s81]]
      %p83 = scmp.lt.s32.totalorder %s82, 0
      %s84 = scalar_select %p83, %s82, 0
      %s85 = scalar_lea.vmem %s7, %s84
      %s86 = sadd.s32 0, 0
      %s87 = smul.u32 %s86, 128
      %s88 = sadd.s32 %s87, 0
      %s89 = sld [smem:[#allocation4 + %s88]]
    $region21: #{tpu_custom_call.1} parent=1 // pred_fallthru
      _
    // Predicated region
    $region22: #{tpu_custom_call.1} parent=1 // pred_check
      _
    $region23: #{tpu_custom_call.1} parent=1 // pred_check_branch
      %91 = sbr.rel (0) target = $region25
    $region24: #{tpu_custom_call.1} parent=1 // pred_region
      %s92 = sadd.s32 0, 0
      %s93 = smul.u32 %s92, 128
      %s94 = sadd.s32 %s93, 0
      %s95 = sld [smem:[#allocation3 + %s94]]
      %s96 = smul.u32 16, %s95
      %p97 = scmp.lt.s32.totalorder %s96, 15
      %s98 = scalar_select %p97, %s96, 15
      %s99 = smul.addr %s98, 8
      %s100 = scalar_lea.vmem %s8, %s99
      %s101 = sadd.s32 0, 0
      %s102 = smul.u32 %s101, 128
      %s103 = sadd.s32 %s102, 0
      %s104 = sld [smem:[#allocation3 + %s103]]
      %s105 = smul.u32 16, %s104
    $region25: #{tpu_custom_call.1} parent=1 // pred_fallthru
      _
    // Predicated region
    $region26: #{tpu_custom_call.1} parent=1 // pred_check
      _
    $region27: #{tpu_custom_call.1} parent=1 // pred_check_branch
      %107 = sbr.rel (0) target = $region29
    $region28: #{tpu_custom_call.1} parent=1 // pred_region
      %s108 = sadd.s32 0, 0
      %s109 = smul.u32 %s108, 128
      %s110 = sadd.s32 %s109, 0
      %s111 = sld [smem:[#allocation4 + %s110]]
      %p112 = scmp.lt.s32.totalorder %s111, 0
      %s113 = scalar_select %p112, %s111, 0
      %s114 = scalar_lea.vmem %s9, %s113
      %s115 = sadd.s32 0, 0
      %s116 = smul.u32 %s115, 128
      %s117 = sadd.s32 %s116, 0
      %s118 = sld [smem:[#allocation4 + %s117]]
    $region29: #{tpu_custom_call.1} parent=1 // pred_fallthru
      _
    // Predicated region
    $region30: #{tpu_custom_call.1} parent=1 // pred_check
      _
    $region31: #{tpu_custom_call.1} parent=1 // pred_check_branch
      %120 = sbr.rel (0) target = $region33
    $region32: #{tpu_custom_call.1} parent=1 // pred_region
      %122 = dma.done [#allocation8], 16
    $region33: #{tpu_custom_call.1} parent=1 // pred_fallthru
      _
    %123 = sfence
    %s124 = sadd.s32 0, 0
    %s125 = smul.u32 %s124, 128
    %s126 = sadd.s32 %s125, 0
    %s127 = sld [smem:[#allocation3 + %s126]]
    %s128 = smul.u32 16, %s127
    %p129 = scmp.lt.s32.totalorder %s128, 15
    %s130 = scalar_select %p129, %s128, 15
    %s131 = smul.addr %s130, 4
    %s132 = scalar_lea.vmem %s4, %s131
    %s133 = sadd.s32 0, 0
    %s134 = smul.u32 %s133, 128
    %s135 = sadd.s32 %s134, 0
    %s136 = sld [smem:[#allocation4 + %s135]]
    %s137 = smul.u32 16, %s136
    %p138 = scmp.lt.s32.totalorder %s137, 15
    %s139 = scalar_select %p138, %s137, 15
    %s140 = smul.addr %s139, 4
    %s141 = scalar_lea.vmem %s5, %s140
    %s142 = sadd.s32 0, 0
    %s143 = smul.u32 %s142, 128
    %s144 = sadd.s32 %s143, 0
    %s145 = sld [smem:[#allocation3 + %s144]]
    %s146 = smul.u32 16, %s145
    %p147 = scmp.lt.s32.totalorder %s146, 15
    %s148 = scalar_select %p147, %s146, 15
    %s149 = smul.addr %s148, 8
    %s150 = scalar_lea.vmem %s6, %s149
    %s151 = sadd.s32 0, 0
    %s152 = smul.u32 %s151, 128
    %s153 = sadd.s32 %s152, 0
    %s154 = sld [smem:[#allocation4 + %s153]]
    %p155 = scmp.lt.s32.totalorder %s154, 0
    %s156 = scalar_select %p155, %s154, 0
    %s157 = scalar_lea.vmem %s7, %s156
    %s158 = sadd.s32 0, 0
    %s159 = smul.u32 %s158, 128
    %s160 = sadd.s32 %s159, 0
    %s161 = sld [smem:[#allocation3 + %s160]]
    %s162 = smul.u32 16, %s161
    %p163 = scmp.lt.s32.totalorder %s162, 15
    %s164 = scalar_select %p163, %s162, 15
    %s165 = smul.addr %s164, 8
    %s166 = scalar_lea.vmem %s8, %s165
    %s167 = sadd.s32 0, 0
    %s168 = smul.u32 %s167, 128
    %s169 = sadd.s32 %s168, 0
    %s170 = sld [smem:[#allocation4 + %s169]]
    %p171 = scmp.lt.s32.totalorder %s170, 0
    %s172 = scalar_select %p171, %s170, 0
    %s173 = scalar_lea.vmem %s9, %s172
    %s174 = sadd.s32 0, 0
    %s175 = smul.u32 %s174, 128
    %s176 = sadd.s32 %s175, 0
    %s177 = sld [smem:[#allocation3 + %s176]]
    %s178 = smul.u32 16, %s177
    %p179 = scmp.lt.s32.totalorder %s178, 15
    %s180 = scalar_select %p179, %s178, 15
    %s181 = smul.addr %s180, 4
    %s182 = scalar_lea.vmem %s4, %s181
    %s183 = sadd.s32 0, 0
    %s184 = smul.u32 %s183, 128
    %s185 = sadd.s32 %s184, 0
    %s186 = sld [smem:[#allocation3 + %s185]]
    %s187 = smul.u32 16, %s186
    %s188 = sadd.s32 0, 0
    %s189 = smul.u32 %s188, 128
    %s190 = sadd.s32 %s189, 0
    %s191 = sld [smem:[#allocation4 + %s190]]
    %s192 = smul.u32 16, %s191
    %p193 = scmp.lt.s32.totalorder %s192, 15
    %s194 = scalar_select %p193, %s192, 15
    %s195 = smul.addr %s194, 4
    %s196 = scalar_lea.vmem %s5, %s195
    %s197 = sadd.s32 0, 0
    %s198 = smul.u32 %s197, 128
    %s199 = sadd.s32 %s198, 0
    %s200 = sld [smem:[#allocation4 + %s199]]
    %s201 = smul.u32 16, %s200
    %s202 = sadd.s32 0, 0
    %s203 = smul.u32 %s202, 128
    %s204 = sadd.s32 %s203, 0
    %s205 = sld [smem:[#allocation3 + %s204]]
    %s206 = smul.u32 16, %s205
    %p207 = scmp.lt.s32.totalorder %s206, 15
    %s208 = scalar_select %p207, %s206, 15
    %s209 = smul.addr %s208, 8
    %s210 = scalar_lea.vmem %s6, %s209
    %s211 = sadd.s32 0, 0
    %s212 = smul.u32 %s211, 128
    %s213 = sadd.s32 %s212, 0
    %s214 = sld [smem:[#allocation3 + %s213]]
    %s215 = smul.u32 16, %s214
    %s216 = sadd.s32 0, 0
    %s217 = smul.u32 %s216, 128
    %s218 = sadd.s32 %s217, 0
    %s219 = sld [smem:[#allocation4 + %s218]]
    %p220 = scmp.lt.s32.totalorder %s219, 0
    %s221 = scalar_select %p220, %s219, 0
    %s222 = scalar_lea.vmem %s7, %s221
    %s223 = sadd.s32 0, 0
    %s224 = smul.u32 %s223, 128
    %s225 = sadd.s32 %s224, 0
    %s226 = sld [smem:[#allocation4 + %s225]]
    %s227 = sadd.s32 0, 0
    %s228 = smul.u32 %s227, 128
    %s229 = sadd.s32 %s228, 0
    %s230 = sld [smem:[#allocation3 + %s229]]
    %s231 = smul.u32 16, %s230
    %p232 = scmp.lt.s32.totalorder %s231, 15
    %s233 = scalar_select %p232, %s231, 15
    %s234 = smul.addr %s233, 8
    %s235 = scalar_lea.vmem %s8, %s234
    %s236 = sadd.s32 0, 0
    %s237 = smul.u32 %s236, 128
    %s238 = sadd.s32 %s237, 0
    %s239 = sld [smem:[#allocation3 + %s238]]
    %s240 = smul.u32 16, %s239
    %s241 = sadd.s32 0, 0
    %s242 = smul.u32 %s241, 128
    %s243 = sadd.s32 %s242, 0
    %s244 = sld [smem:[#allocation4 + %s243]]
    %p245 = scmp.lt.s32.totalorder %s244, 0
    %s246 = scalar_select %p245, %s244, 0
    %s247 = scalar_lea.vmem %s9, %s246
    %s248 = sadd.s32 0, 0
    %s249 = smul.u32 %s248, 128
    %s250 = sadd.s32 %s249, 0
    %s251 = sld [smem:[#allocation4 + %s250]]
    %s252 = sadd.s32 0, 0
    %s253 = smul.u32 %s252, 128
    %s254 = sadd.s32 %s253, 0
    %s255 = sld [smem:[#allocation3 + %s254]]
    %s256 = sadd.s32 0, 0
    %s257 = smul.u32 %s256, 128
    %s258 = sadd.s32 %s257, 0
    %s259 = sld [smem:[#allocation3 + %s258]]
    %s260 = sld [smem:[#allocation4 + %s258]]
    %s261 = sld [smem:[#allocation5 + %s258]]
    %p262 = scmp.eq.s32.totalorder %s261, 1
    // Predicated region
    $region34: #{tpu_custom_call.1} parent=1 // pred_check
      %p263 = pneg %p262
    $region35: #{tpu_custom_call.1} parent=1 // pred_check_branch
      %265 = sbr.rel (%p263) target = $region37
    $region36: #{tpu_custom_call.1} parent=1 // pred_region
      %266 = vst [vmem:[#allocation9] sm:$0x1] 0.0
    $region37: #{tpu_custom_call.1} parent=1 // pred_fallthru
      _
    %p267 = scmp.gt.s32.totalorder %s261, 0
    // Predicated region
    $region38: #{tpu_custom_call.1} parent=1 // pred_check
      %p268 = pneg %p267
    $region39: #{tpu_custom_call.1} parent=1 // pred_check_branch
      %270 = sbr.rel (%p268) target = $region41
    $region40: #{tpu_custom_call.1} parent=1 // pred_region
      %v271 = vld [vmem:[%s182] sm:$0xf]
      %v272 = vld [vmem:[%s182 + $0x4] sm:$0xf]
      %v273 = vld [vmem:[%s182 + $0x8] sm:$0xf]
      %v274 = vld [vmem:[%s182 + $0xc] sm:$0xf]
      %v275 = vld [vmem:[%s182 + $0x10] sm:$0xf]
      %v276 = vld [vmem:[%s182 + $0x14] sm:$0xf]
      %v277 = vld [vmem:[%s182 + $0x18] sm:$0xf]
      %v278 = vld [vmem:[%s182 + $0x1c] sm:$0xf]
      %v279 = vld [vmem:[%s182 + $0x20] sm:$0xf]
      %v280 = vld [vmem:[%s182 + $0x24] sm:$0xf]
      %v281 = vld [vmem:[%s182 + $0x28] sm:$0xf]
      %v282 = vld [vmem:[%s182 + $0x2c] sm:$0xf]
      %v283 = vld [vmem:[%s182 + $0x30] sm:$0xf]
      %v284 = vld [vmem:[%s182 + $0x34] sm:$0xf]
      %v285 = vld [vmem:[%s182 + $0x38] sm:$0xf]
      %v286 = vld [vmem:[%s182 + $0x3c] sm:$0xf]
      %v287 = vld [vmem:[%s196] sm:$0xf]
      %v288 = vld [vmem:[%s196 + $0x4] sm:$0xf]
      %v289 = vld [vmem:[%s196 + $0x8] sm:$0xf]
      %v290 = vld [vmem:[%s196 + $0xc] sm:$0xf]
      %v291 = vld [vmem:[%s196 + $0x10] sm:$0xf]
      %v292 = vld [vmem:[%s196 + $0x14] sm:$0xf]
      %v293 = vld [vmem:[%s196 + $0x18] sm:$0xf]
      %v294 = vld [vmem:[%s196 + $0x1c] sm:$0xf]
      %v295 = vld [vmem:[%s196 + $0x20] sm:$0xf]
      %v296 = vld [vmem:[%s196 + $0x24] sm:$0xf]
      %v297 = vld [vmem:[%s196 + $0x28] sm:$0xf]
      %v298 = vld [vmem:[%s196 + $0x2c] sm:$0xf]
      %v299 = vld [vmem:[%s196 + $0x30] sm:$0xf]
      %v300 = vld [vmem:[%s196 + $0x34] sm:$0xf]
      %v301 = vld [vmem:[%s196 + $0x38] sm:$0xf]
      %v302 = vld [vmem:[%s196 + $0x3c] sm:$0xf]
      %v319 = vunpack.c.l.b16 %v271
      %v320 = vunpack.c.l.b16 %v272
      %v321 = vunpack.c.l.b16 %v273
      %v322 = vunpack.c.l.b16 %v274
      %v323 = vunpack.c.l.b16 %v275
      %v324 = vunpack.c.l.b16 %v276
      %v325 = vunpack.c.l.b16 %v277
      %v326 = vunpack.c.l.b16 %v278
      %v327 = vunpack.c.l.b16 %v279
      %v328 = vunpack.c.l.b16 %v280
      %v329 = vunpack.c.l.b16 %v281
      %v330 = vunpack.c.l.b16 %v282
      %v331 = vunpack.c.l.b16 %v283
      %v332 = vunpack.c.l.b16 %v284
      %v333 = vunpack.c.l.b16 %v285
      %v334 = vunpack.c.l.b16 %v286
      %v335 = vpack.c.b16 %v320, %v319
      %v336 = vpack.c.b16 %v322, %v321
      %v337 = vpack.c.b16 %v324, %v323
      %v338 = vpack.c.b16 %v326, %v325
      %v339 = vpack.c.b16 %v328, %v327
      %v340 = vpack.c.b16 %v330, %v329
      %v341 = vpack.c.b16 %v332, %v331
      %v342 = vpack.c.b16 %v334, %v333
      %v367 = vunpack.c.l.b16 %v287
      %v368 = vunpack.c.l.b16 %v288
      %v369 = vunpack.c.l.b16 %v289
      %v370 = vunpack.c.l.b16 %v290
      %v371 = vunpack.c.l.b16 %v291
      %v372 = vunpack.c.l.b16 %v292
      %v373 = vunpack.c.l.b16 %v293
      %v374 = vunpack.c.l.b16 %v294
      %v375 = vunpack.c.l.b16 %v295
      %v376 = vunpack.c.l.b16 %v296
      %v377 = vunpack.c.l.b16 %v297
      %v378 = vunpack.c.l.b16 %v298
      %v379 = vunpack.c.l.b16 %v299
      %v380 = vunpack.c.l.b16 %v300
      %v381 = vunpack.c.l.b16 %v301
      %v382 = vunpack.c.l.b16 %v302
      %v383 = vpack.c.b16 %v368, %v367
      %v384 = vpack.c.b16 %v370, %v369
      %v385 = vpack.c.b16 %v372, %v371
      %v386 = vpack.c.b16 %v374, %v373
      %v387 = vpack.c.b16 %v376, %v375
      %v388 = vpack.c.b16 %v378, %v377
      %v389 = vpack.c.b16 %v380, %v379
      %v390 = vpack.c.b16 %v382, %v381
      %399 = vmatpush.bf16.xpose.msra.mxu0 %v390
      %400 = vmatpush.bf16.xpose.msra.mxu0 %v389
      %401 = vmatpush.bf16.xpose.msra.mxu0 %v388
      %402 = vmatpush.bf16.xpose.msra.mxu0 %v387
      %403 = vmatpush.bf16.xpose.msra.mxu0 %v386
      %404 = vmatpush.bf16.xpose.msra.mxu0 %v385
      %405 = vmatpush.bf16.xpose.msra.mxu0 %v384
      %406 = vmatpush.bf16.xpose.msra.mxu0 %v383
      %407 = vmatmul.bf16.gmra.mxu0 %v335
      %v408 = vpop.f32.mrf.mxu0
      %v409 = vadd.f32 0.0, %v408
      %v410 = vpop.f32.mrf.mxu0
      %v411 = vadd.f32 0.0, %v410
      %412 = vmatmul.bf16.gmra.mxu0 %v336
      %v413 = vpop.f32.mrf.mxu0
      %v414 = vadd.f32 0.0, %v413
      %v415 = vpop.f32.mrf.mxu0
      %v416 = vadd.f32 0.0, %v415
      %417 = vmatmul.bf16.gmra.mxu0 %v337
      %v418 = vpop.f32.mrf.mxu0
      %v419 = vadd.f32 0.0, %v418
      %v420 = vpop.f32.mrf.mxu0
      %v421 = vadd.f32 0.0, %v420
      %422 = vmatmul.bf16.gmra.mxu0 %v338
      %v423 = vpop.f32.mrf.mxu0
      %v424 = vadd.f32 0.0, %v423
      %v425 = vpop.f32.mrf.mxu0
      %v426 = vadd.f32 0.0, %v425
      %427 = vmatmul.bf16.gmra.mxu0 %v339
      %v428 = vpop.f32.mrf.mxu0
      %v429 = vadd.f32 0.0, %v428
      %v430 = vpop.f32.mrf.mxu0
      %v431 = vadd.f32 0.0, %v430
      %432 = vmatmul.bf16.gmra.mxu0 %v340
      %v433 = vpop.f32.mrf.mxu0
      %v434 = vadd.f32 0.0, %v433
      %v435 = vpop.f32.mrf.mxu0
      %v436 = vadd.f32 0.0, %v435
      %437 = vmatmul.bf16.gmra.mxu0 %v341
      %v438 = vpop.f32.mrf.mxu0
      %v439 = vadd.f32 0.0, %v438
      %v440 = vpop.f32.mrf.mxu0
      %v441 = vadd.f32 0.0, %v440
      %442 = vmatmul.bf16.gmra.mxu0 %v342
      %v443 = vpop.f32.mrf.mxu0
      %v444 = vadd.f32 0.0, %v443
      %v445 = vpop.f32.mrf.mxu0
      %v446 = vadd.f32 0.0, %v445
      %447 = vdwg.mxu0
      %v448 = vld [vmem:[%s210] sm:$0xff]
      %v449 = vld [vmem:[%s210 + $0x8] sm:$0xff]
      %v450 = vld [vmem:[%s210 + $0x10] sm:$0xff]
      %v451 = vld [vmem:[%s210 + $0x18] sm:$0xff]
      %v452 = vld [vmem:[%s210 + $0x20] sm:$0xff]
      %v453 = vld [vmem:[%s210 + $0x28] sm:$0xff]
      %v454 = vld [vmem:[%s210 + $0x30] sm:$0xff]
      %v455 = vld [vmem:[%s210 + $0x38] sm:$0xff]
      %v456 = vld [vmem:[%s210 + $0x40] sm:$0xff]
      %v457 = vld [vmem:[%s210 + $0x48] sm:$0xff]
      %v458 = vld [vmem:[%s210 + $0x50] sm:$0xff]
      %v459 = vld [vmem:[%s210 + $0x58] sm:$0xff]
      %v460 = vld [vmem:[%s210 + $0x60] sm:$0xff]
      %v461 = vld [vmem:[%s210 + $0x68] sm:$0xff]
      %v462 = vld [vmem:[%s210 + $0x70] sm:$0xff]
      %v463 = vld [vmem:[%s210 + $0x78] sm:$0xff]
      %v464 = vld [vmem:[%s222] sm:$0x1]
      %466 = vset.pattern.permute.xlu0 0
      %467 = vperm.xlu0 %466, %v448
      %v468 = vpop.permute.xlu0 %467
      %471 = vset.pattern.permute.xlu0 0
      %472 = vperm.xlu0 %471, %v449
      %v473 = vpop.permute.xlu0 %472
      %476 = vset.pattern.permute.xlu0 0
      %477 = vperm.xlu0 %476, %v450
      %v478 = vpop.permute.xlu0 %477
      %481 = vset.pattern.permute.xlu0 0
      %482 = vperm.xlu0 %481, %v451
      %v483 = vpop.permute.xlu0 %482
      %486 = vset.pattern.permute.xlu0 0
      %487 = vperm.xlu0 %486, %v452
      %v488 = vpop.permute.xlu0 %487
      %491 = vset.pattern.permute.xlu0 0
      %492 = vperm.xlu0 %491, %v453
      %v493 = vpop.permute.xlu0 %492
      %496 = vset.pattern.permute.xlu0 0
      %497 = vperm.xlu0 %496, %v454
      %v498 = vpop.permute.xlu0 %497
      %501 = vset.pattern.permute.xlu0 0
      %502 = vperm.xlu0 %501, %v455
      %v503 = vpop.permute.xlu0 %502
      %506 = vset.pattern.permute.xlu0 0
      %507 = vperm.xlu0 %506, %v456
      %v508 = vpop.permute.xlu0 %507
      %511 = vset.pattern.permute.xlu0 0
      %512 = vperm.xlu0 %511, %v457
      %v513 = vpop.permute.xlu0 %512
      %516 = vset.pattern.permute.xlu0 0
      %517 = vperm.xlu0 %516, %v458
      %v518 = vpop.permute.xlu0 %517
      %521 = vset.pattern.permute.xlu0 0
      %522 = vperm.xlu0 %521, %v459
      %v523 = vpop.permute.xlu0 %522
      %526 = vset.pattern.permute.xlu0 0
      %527 = vperm.xlu0 %526, %v460
      %v528 = vpop.permute.xlu0 %527
      %531 = vset.pattern.permute.xlu0 0
      %532 = vperm.xlu0 %531, %v461
      %v533 = vpop.permute.xlu0 %532
      %536 = vset.pattern.permute.xlu0 0
      %537 = vperm.xlu0 %536, %v462
      %v538 = vpop.permute.xlu0 %537
      %541 = vset.pattern.permute.xlu0 0
      %542 = vperm.xlu0 %541, %v463
      %v543 = vpop.permute.xlu0 %542
      %v546 = vperm.slane %v464, 0
      %v548 = vadd.f32 %v468, %v546
      %v549 = vadd.f32 %v473, %v546
      %v550 = vadd.f32 %v478, %v546
      %v551 = vadd.f32 %v483, %v546
      %v552 = vadd.f32 %v488, %v546
      %v553 = vadd.f32 %v493, %v546
      %v554 = vadd.f32 %v498, %v546
      %v555 = vadd.f32 %v503, %v546
      %v556 = vadd.f32 %v508, %v546
      %v557 = vadd.f32 %v513, %v546
      %v558 = vadd.f32 %v518, %v546
      %v559 = vadd.f32 %v523, %v546
      %v560 = vadd.f32 %v528, %v546
      %v561 = vadd.f32 %v533, %v546
      %v562 = vadd.f32 %v538, %v546
      %v563 = vadd.f32 %v543, %v546
      %v564 = vmul.f32 %v409, 2.0
      %v565 = vmul.f32 %v411, 2.0
      %v566 = vmul.f32 %v414, 2.0
      %v567 = vmul.f32 %v416, 2.0
      %v568 = vmul.f32 %v419, 2.0
      %v569 = vmul.f32 %v421, 2.0
      %v570 = vmul.f32 %v424, 2.0
      %v571 = vmul.f32 %v426, 2.0
      %v572 = vmul.f32 %v429, 2.0
      %v573 = vmul.f32 %v431, 2.0
      %v574 = vmul.f32 %v434, 2.0
      %v575 = vmul.f32 %v436, 2.0
      %v576 = vmul.f32 %v439, 2.0
      %v577 = vmul.f32 %v441, 2.0
      %v578 = vmul.f32 %v444, 2.0
      %v579 = vmul.f32 %v446, 2.0
      %v580 = vsub.f32 %v548, %v564
      %v581 = vsub.f32 %v549, %v565
      %v582 = vsub.f32 %v550, %v566
      %v583 = vsub.f32 %v551, %v567
      %v584 = vsub.f32 %v552, %v568
      %v585 = vsub.f32 %v553, %v569
      %v586 = vsub.f32 %v554, %v570
      %v587 = vsub.f32 %v555, %v571
      %v588 = vsub.f32 %v556, %v572
      %v589 = vsub.f32 %v557, %v573
      %v590 = vsub.f32 %v558, %v574
      %v591 = vsub.f32 %v559, %v575
      %v592 = vsub.f32 %v560, %v576
      %v593 = vsub.f32 %v561, %v577
      %v594 = vsub.f32 %v562, %v578
      %v595 = vsub.f32 %v563, %v579
      %v596 = vmax.f32 %v580, 0.0
      %v597 = vmax.f32 %v581, 0.0
      %v598 = vmax.f32 %v582, 0.0
      %v599 = vmax.f32 %v583, 0.0
      %v600 = vmax.f32 %v584, 0.0
      %v601 = vmax.f32 %v585, 0.0
      %v602 = vmax.f32 %v586, 0.0
      %v603 = vmax.f32 %v587, 0.0
      %v604 = vmax.f32 %v588, 0.0
      %v605 = vmax.f32 %v589, 0.0
      %v606 = vmax.f32 %v590, 0.0
      %v607 = vmax.f32 %v591, 0.0
      %v608 = vmax.f32 %v592, 0.0
      %v609 = vmax.f32 %v593, 0.0
      %v610 = vmax.f32 %v594, 0.0
      %v611 = vmax.f32 %v595, 0.0
      %v612 = vlaneseq
      %v613 = vshrl.u32 %v612, 7
      %v614 = vadd.s32 %v613, 8
      %v615 = vadd.s32 %v613, 16
      %v616 = vadd.s32 %v613, 24
      %v617 = vadd.s32 %v613, 32
      %v618 = vadd.s32 %v613, 40
      %v619 = vadd.s32 %v613, 48
      %v620 = vadd.s32 %v613, 56
      %v621 = vadd.s32 %v613, 64
      %v622 = vadd.s32 %v613, 72
      %v623 = vadd.s32 %v613, 80
      %v624 = vadd.s32 %v613, 88
      %v625 = vadd.s32 %v613, 96
      %v626 = vadd.s32 %v613, 104
      %v627 = vadd.s32 %v613, 112
      %v628 = vadd.s32 %v613, 120
      %v629 = vlaneseq
      %v630 = vand.u32 %v629, 127
      %p631 = scmp.eq.s32.totalorder %s259, %s260
      %vm632 = vcmp.eq.s32.totalorder %v613, %v630
      %vm633 = vcmp.eq.s32.totalorder %v614, %v630
      %vm634 = vcmp.eq.s32.totalorder %v615, %v630
      %vm635 = vcmp.eq.s32.totalorder %v616, %v630
      %vm636 = vcmp.eq.s32.totalorder %v617, %v630
      %vm637 = vcmp.eq.s32.totalorder %v618, %v630
      %vm638 = vcmp.eq.s32.totalorder %v619, %v630
      %vm639 = vcmp.eq.s32.totalorder %v620, %v630
      %vm640 = vcmp.eq.s32.totalorder %v621, %v630
      %vm641 = vcmp.eq.s32.totalorder %v622, %v630
      %vm642 = vcmp.eq.s32.totalorder %v623, %v630
      %vm643 = vcmp.eq.s32.totalorder %v624, %v630
      %vm644 = vcmp.eq.s32.totalorder %v625, %v630
      %vm645 = vcmp.eq.s32.totalorder %v626, %v630
      %vm646 = vcmp.eq.s32.totalorder %v627, %v630
      %vm647 = vcmp.eq.s32.totalorder %v628, %v630
      %s648 = scalar_select %p631, 1, 0
      %v649 = vstv %s648
      %vm650 = vcmp.eq.s32.totalorder %v649, 1
      %vm651 = vmand %vm650, %vm632
      %vm652 = vmand %vm650, %vm633
      %vm653 = vmand %vm650, %vm634
      %vm654 = vmand %vm650, %vm635
      %vm655 = vmand %vm650, %vm636
      %vm656 = vmand %vm650, %vm637
      %vm657 = vmand %vm650, %vm638
      %vm658 = vmand %vm650, %vm639
      %vm659 = vmand %vm650, %vm640
      %vm660 = vmand %vm650, %vm641
      %vm661 = vmand %vm650, %vm642
      %vm662 = vmand %vm650, %vm643
      %vm663 = vmand %vm650, %vm644
      %vm664 = vmand %vm650, %vm645
      %vm665 = vmand %vm650, %vm646
      %vm666 = vmand %vm650, %vm647
      %v667 = vsel %vm651, 0.0, %v596
      %v668 = vsel %vm652, 0.0, %v597
      %v669 = vsel %vm653, 0.0, %v598
      %v670 = vsel %vm654, 0.0, %v599
      %v671 = vsel %vm655, 0.0, %v600
      %v672 = vsel %vm656, 0.0, %v601
      %v673 = vsel %vm657, 0.0, %v602
      %v674 = vsel %vm658, 0.0, %v603
      %v675 = vsel %vm659, 0.0, %v604
      %v676 = vsel %vm660, 0.0, %v605
      %v677 = vsel %vm661, 0.0, %v606
      %v678 = vsel %vm662, 0.0, %v607
      %v679 = vsel %vm663, 0.0, %v608
      %v680 = vsel %vm664, 0.0, %v609
      %v681 = vsel %vm665, 0.0, %v610
      %v682 = vsel %vm666, 0.0, %v611
      %v683 = vpack.c.bf16 %v667, %v667
      %v684 = vpack.c.bf16 %v668, %v668
      %v685 = vpack.c.bf16 %v669, %v669
      %v686 = vpack.c.bf16 %v670, %v670
      %v687 = vpack.c.bf16 %v671, %v671
      %v688 = vpack.c.bf16 %v672, %v672
      %v689 = vpack.c.bf16 %v673, %v673
      %v690 = vpack.c.bf16 %v674, %v674
      %v691 = vpack.c.bf16 %v675, %v675
      %v692 = vpack.c.bf16 %v676, %v676
      %v693 = vpack.c.bf16 %v677, %v677
      %v694 = vpack.c.bf16 %v678, %v678
      %v695 = vpack.c.bf16 %v679, %v679
      %v696 = vpack.c.bf16 %v680, %v680
      %v697 = vpack.c.bf16 %v681, %v681
      %v698 = vpack.c.bf16 %v682, %v682
      %s699 = sld [smem:[#allocation6]]
      %p701 = scmp.ne.f32.partialorder %s699, %s699
      %s702 = sshrl.u32 %s699, 16
      %s703 = sand.u32 %s702, 1
      %s704 = sadd.s32 32767, %s703
      %s705 = sadd.s32 %s699, %s704
      %s706 = sand.u32 %s705, 4294901760
      %s707 = scalar_select %p701, 2143289344, %s706
      %s709 = sshrl.u32 %s707, 16
      %s710 = sshll.u32 %s709, 16
      %s711 = sor.u32 %s709, %s710
      %v712 = vstv %s711
      %v714 = vunpack.c.l.bf16 %v683
      %v715 = vunpack.c.l.bf16 %v684
      %v716 = vunpack.c.l.bf16 %v685
      %v717 = vunpack.c.l.bf16 %v686
      %v718 = vunpack.c.l.bf16 %v687
      %v719 = vunpack.c.l.bf16 %v688
      %v720 = vunpack.c.l.bf16 %v689
      %v721 = vunpack.c.l.bf16 %v690
      %v722 = vunpack.c.l.bf16 %v691
      %v723 = vunpack.c.l.bf16 %v692
      %v724 = vunpack.c.l.bf16 %v693
      %v725 = vunpack.c.l.bf16 %v694
      %v726 = vunpack.c.l.bf16 %v695
      %v727 = vunpack.c.l.bf16 %v696
      %v728 = vunpack.c.l.bf16 %v697
      %v729 = vunpack.c.l.bf16 %v698
      %v730 = vunpack.c.l.bf16 %v712
      %v731 = vmul.f32 %v714, %v730
      %v732 = vmul.f32 %v715, %v730
      %v733 = vmul.f32 %v716, %v730
      %v734 = vmul.f32 %v717, %v730
      %v735 = vmul.f32 %v718, %v730
      %v736 = vmul.f32 %v719, %v730
      %v737 = vmul.f32 %v720, %v730
      %v738 = vmul.f32 %v721, %v730
      %v739 = vmul.f32 %v722, %v730
      %v740 = vmul.f32 %v723, %v730
      %v741 = vmul.f32 %v724, %v730
      %v742 = vmul.f32 %v725, %v730
      %v743 = vmul.f32 %v726, %v730
      %v744 = vmul.f32 %v727, %v730
      %v745 = vmul.f32 %v728, %v730
      %v746 = vmul.f32 %v729, %v730
      %v747 = vpack.c.bf16 %v731, %v731
      %v748 = vpack.c.bf16 %v732, %v732
      %v749 = vpack.c.bf16 %v733, %v733
      %v750 = vpack.c.bf16 %v734, %v734
      %v751 = vpack.c.bf16 %v735, %v735
      %v752 = vpack.c.bf16 %v736, %v736
      %v753 = vpack.c.bf16 %v737, %v737
      %v754 = vpack.c.bf16 %v738, %v738
      %v755 = vpack.c.bf16 %v739, %v739
      %v756 = vpack.c.bf16 %v740, %v740
      %v757 = vpack.c.bf16 %v741, %v741
      %v758 = vpack.c.bf16 %v742, %v742
      %v759 = vpack.c.bf16 %v743, %v743
      %v760 = vpack.c.bf16 %v744, %v744
      %v761 = vpack.c.bf16 %v745, %v745
      %v762 = vpack.c.bf16 %v746, %v746
      %v763 = vunpack.c.l.bf16 %v747
      %v764 = vunpack.c.l.bf16 %v748
      %v765 = vunpack.c.l.bf16 %v749
      %v766 = vunpack.c.l.bf16 %v750
      %v767 = vunpack.c.l.bf16 %v751
      %v768 = vunpack.c.l.bf16 %v752
      %v769 = vunpack.c.l.bf16 %v753
      %v770 = vunpack.c.l.bf16 %v754
      %v771 = vunpack.c.l.bf16 %v755
      %v772 = vunpack.c.l.bf16 %v756
      %v773 = vunpack.c.l.bf16 %v757
      %v774 = vunpack.c.l.bf16 %v758
      %v775 = vunpack.c.l.bf16 %v759
      %v776 = vunpack.c.l.bf16 %v760
      %v777 = vunpack.c.l.bf16 %v761
      %v778 = vunpack.c.l.bf16 %v762
      %v779 = vmul.f32 %v763, 1.442695
      %v780 = vpow.pop %v779
      %v781 = vmul.f32 %v764, 1.442695
      %v782 = vpow.pop %v781
      %v783 = vmul.f32 %v765, 1.442695
      %v784 = vpow.pop %v783
      %v785 = vmul.f32 %v766, 1.442695
      %v786 = vpow.pop %v785
      %v787 = vmul.f32 %v767, 1.442695
      %v788 = vpow.pop %v787
      %v789 = vmul.f32 %v768, 1.442695
      %v790 = vpow.pop %v789
      %v791 = vmul.f32 %v769, 1.442695
      %v792 = vpow.pop %v791
      %v793 = vmul.f32 %v770, 1.442695
      %v794 = vpow.pop %v793
      %v795 = vmul.f32 %v771, 1.442695
      %v796 = vpow.pop %v795
      %v797 = vmul.f32 %v772, 1.442695
      %v798 = vpow.pop %v797
      %v799 = vmul.f32 %v773, 1.442695
      %v800 = vpow.pop %v799
      %v801 = vmul.f32 %v774, 1.442695
      %v802 = vpow.pop %v801
      %v803 = vmul.f32 %v775, 1.442695
      %v804 = vpow.pop %v803
      %v805 = vmul.f32 %v776, 1.442695
      %v806 = vpow.pop %v805
      %v807 = vmul.f32 %v777, 1.442695
      %v808 = vpow.pop %v807
      %v809 = vmul.f32 %v778, 1.442695
      %v810 = vpow.pop %v809
      %v811 = vpack.c.bf16 %v780, %v780
      %v812 = vpack.c.bf16 %v782, %v782
      %v813 = vpack.c.bf16 %v784, %v784
      %v814 = vpack.c.bf16 %v786, %v786
      %v815 = vpack.c.bf16 %v788, %v788
      %v816 = vpack.c.bf16 %v790, %v790
      %v817 = vpack.c.bf16 %v792, %v792
      %v818 = vpack.c.bf16 %v794, %v794
      %v819 = vpack.c.bf16 %v796, %v796
      %v820 = vpack.c.bf16 %v798, %v798
      %v821 = vpack.c.bf16 %v800, %v800
      %v822 = vpack.c.bf16 %v802, %v802
      %v823 = vpack.c.bf16 %v804, %v804
      %v824 = vpack.c.bf16 %v806, %v806
      %v825 = vpack.c.bf16 %v808, %v808
      %v826 = vpack.c.bf16 %v810, %v810
      %v827 = vunpack.c.l.bf16 %v811
      %v828 = vunpack.c.l.bf16 %v812
      %v829 = vunpack.c.l.bf16 %v813
      %v830 = vunpack.c.l.bf16 %v814
      %v831 = vunpack.c.l.bf16 %v815
      %v832 = vunpack.c.l.bf16 %v816
      %v833 = vunpack.c.l.bf16 %v817
      %v834 = vunpack.c.l.bf16 %v818
      %v835 = vunpack.c.l.bf16 %v819
      %v836 = vunpack.c.l.bf16 %v820
      %v837 = vunpack.c.l.bf16 %v821
      %v838 = vunpack.c.l.bf16 %v822
      %v839 = vunpack.c.l.bf16 %v823
      %v840 = vunpack.c.l.bf16 %v824
      %v841 = vunpack.c.l.bf16 %v825
      %v842 = vunpack.c.l.bf16 %v826
      %v843 = vadd.f32 %v827, 0.0
      %v844 = vadd.f32 %v828, 0.0
      %v845 = vadd.f32 %v829, 0.0
      %v846 = vadd.f32 %v830, 0.0
      %v847 = vadd.f32 %v831, 0.0
      %v848 = vadd.f32 %v832, 0.0
      %v849 = vadd.f32 %v833, 0.0
      %v850 = vadd.f32 %v834, 0.0
      %v851 = vadd.f32 %v835, 0.0
      %v852 = vadd.f32 %v836, 0.0
      %v853 = vadd.f32 %v837, 0.0
      %v854 = vadd.f32 %v838, 0.0
      %v855 = vadd.f32 %v839, 0.0
      %v856 = vadd.f32 %v840, 0.0
      %v857 = vadd.f32 %v841, 0.0
      %v858 = vadd.f32 %v842, 0.0
      %s859 = sld [smem:[#allocation6 + $0x1]]
      %p861 = scmp.ne.f32.partialorder %s859, %s859
      %s862 = sshrl.u32 %s859, 16
      %s863 = sand.u32 %s862, 1
      %s864 = sadd.s32 32767, %s863
      %s865 = sadd.s32 %s859, %s864
      %s866 = sand.u32 %s865, 4294901760
      %s867 = scalar_select %p861, 2143289344, %s866
      %s869 = sshrl.u32 %s867, 16
      %s870 = sshll.u32 %s869, 16
      %s871 = sor.u32 %s869, %s870
      %v872 = vstv %s871
      %v874 = vunpack.c.l.bf16 %v872
      %v875 = vmul.f32 %v714, %v874
      %v876 = vmul.f32 %v715, %v874
      %v877 = vmul.f32 %v716, %v874
      %v878 = vmul.f32 %v717, %v874
      %v879 = vmul.f32 %v718, %v874
      %v880 = vmul.f32 %v719, %v874
      %v881 = vmul.f32 %v720, %v874
      %v882 = vmul.f32 %v721, %v874
      %v883 = vmul.f32 %v722, %v874
      %v884 = vmul.f32 %v723, %v874
      %v885 = vmul.f32 %v724, %v874
      %v886 = vmul.f32 %v725, %v874
      %v887 = vmul.f32 %v726, %v874
      %v888 = vmul.f32 %v727, %v874
      %v889 = vmul.f32 %v728, %v874
      %v890 = vmul.f32 %v729, %v874
      %v891 = vpack.c.bf16 %v875, %v875
      %v892 = vpack.c.bf16 %v876, %v876
      %v893 = vpack.c.bf16 %v877, %v877
      %v894 = vpack.c.bf16 %v878, %v878
      %v895 = vpack.c.bf16 %v879, %v879
      %v896 = vpack.c.bf16 %v880, %v880
      %v897 = vpack.c.bf16 %v881, %v881
      %v898 = vpack.c.bf16 %v882, %v882
      %v899 = vpack.c.bf16 %v883, %v883
      %v900 = vpack.c.bf16 %v884, %v884
      %v901 = vpack.c.bf16 %v885, %v885
      %v902 = vpack.c.bf16 %v886, %v886
      %v903 = vpack.c.bf16 %v887, %v887
      %v904 = vpack.c.bf16 %v888, %v888
      %v905 = vpack.c.bf16 %v889, %v889
      %v906 = vpack.c.bf16 %v890, %v890
      %v907 = vunpack.c.l.bf16 %v891
      %v908 = vunpack.c.l.bf16 %v892
      %v909 = vunpack.c.l.bf16 %v893
      %v910 = vunpack.c.l.bf16 %v894
      %v911 = vunpack.c.l.bf16 %v895
      %v912 = vunpack.c.l.bf16 %v896
      %v913 = vunpack.c.l.bf16 %v897
      %v914 = vunpack.c.l.bf16 %v898
      %v915 = vunpack.c.l.bf16 %v899
      %v916 = vunpack.c.l.bf16 %v900
      %v917 = vunpack.c.l.bf16 %v901
      %v918 = vunpack.c.l.bf16 %v902
      %v919 = vunpack.c.l.bf16 %v903
      %v920 = vunpack.c.l.bf16 %v904
      %v921 = vunpack.c.l.bf16 %v905
      %v922 = vunpack.c.l.bf16 %v906
      %v923 = vmul.f32 %v907, 1.442695
      %v924 = vpow.pop %v923
      %v925 = vmul.f32 %v908, 1.442695
      %v926 = vpow.pop %v925
      %v927 = vmul.f32 %v909, 1.442695
      %v928 = vpow.pop %v927
      %v929 = vmul.f32 %v910, 1.442695
      %v930 = vpow.pop %v929
      %v931 = vmul.f32 %v911, 1.442695
      %v932 = vpow.pop %v931
      %v933 = vmul.f32 %v912, 1.442695
      %v934 = vpow.pop %v933
      %v935 = vmul.f32 %v913, 1.442695
      %v936 = vpow.pop %v935
      %v937 = vmul.f32 %v914, 1.442695
      %v938 = vpow.pop %v937
      %v939 = vmul.f32 %v915, 1.442695
      %v940 = vpow.pop %v939
      %v941 = vmul.f32 %v916, 1.442695
      %v942 = vpow.pop %v941
      %v943 = vmul.f32 %v917, 1.442695
      %v944 = vpow.pop %v943
      %v945 = vmul.f32 %v918, 1.442695
      %v946 = vpow.pop %v945
      %v947 = vmul.f32 %v919, 1.442695
      %v948 = vpow.pop %v947
      %v949 = vmul.f32 %v920, 1.442695
      %v950 = vpow.pop %v949
      %v951 = vmul.f32 %v921, 1.442695
      %v952 = vpow.pop %v951
      %v953 = vmul.f32 %v922, 1.442695
      %v954 = vpow.pop %v953
      %v955 = vpack.c.bf16 %v924, %v924
      %v956 = vpack.c.bf16 %v926, %v926
      %v957 = vpack.c.bf16 %v928, %v928
      %v958 = vpack.c.bf16 %v930, %v930
      %v959 = vpack.c.bf16 %v932, %v932
      %v960 = vpack.c.bf16 %v934, %v934
      %v961 = vpack.c.bf16 %v936, %v936
      %v962 = vpack.c.bf16 %v938, %v938
      %v963 = vpack.c.bf16 %v940, %v940
      %v964 = vpack.c.bf16 %v942, %v942
      %v965 = vpack.c.bf16 %v944, %v944
      %v966 = vpack.c.bf16 %v946, %v946
      %v967 = vpack.c.bf16 %v948, %v948
      %v968 = vpack.c.bf16 %v950, %v950
      %v969 = vpack.c.bf16 %v952, %v952
      %v970 = vpack.c.bf16 %v954, %v954
      %v971 = vunpack.c.l.bf16 %v955
      %v972 = vunpack.c.l.bf16 %v956
      %v973 = vunpack.c.l.bf16 %v957
      %v974 = vunpack.c.l.bf16 %v958
      %v975 = vunpack.c.l.bf16 %v959
      %v976 = vunpack.c.l.bf16 %v960
      %v977 = vunpack.c.l.bf16 %v961
      %v978 = vunpack.c.l.bf16 %v962
      %v979 = vunpack.c.l.bf16 %v963
      %v980 = vunpack.c.l.bf16 %v964
      %v981 = vunpack.c.l.bf16 %v965
      %v982 = vunpack.c.l.bf16 %v966
      %v983 = vunpack.c.l.bf16 %v967
      %v984 = vunpack.c.l.bf16 %v968
      %v985 = vunpack.c.l.bf16 %v969
      %v986 = vunpack.c.l.bf16 %v970
      %v987 = vadd.f32 %v843, %v971
      %v988 = vadd.f32 %v844, %v972
      %v989 = vadd.f32 %v845, %v973
      %v990 = vadd.f32 %v846, %v974
      %v991 = vadd.f32 %v847, %v975
      %v992 = vadd.f32 %v848, %v976
      %v993 = vadd.f32 %v849, %v977
      %v994 = vadd.f32 %v850, %v978
      %v995 = vadd.f32 %v851, %v979
      %v996 = vadd.f32 %v852, %v980
      %v997 = vadd.f32 %v853, %v981
      %v998 = vadd.f32 %v854, %v982
      %v999 = vadd.f32 %v855, %v983
      %v1000 = vadd.f32 %v856, %v984
      %v1001 = vadd.f32 %v857, %v985
      %v1002 = vadd.f32 %v858, %v986
      %s1003 = sld [smem:[#allocation6 + $0x2]]
      %p1005 = scmp.ne.f32.partialorder %s1003, %s1003
      %s1006 = sshrl.u32 %s1003, 16
      %s1007 = sand.u32 %s1006, 1
      %s1008 = sadd.s32 32767, %s1007
      %s1009 = sadd.s32 %s1003, %s1008
      %s1010 = sand.u32 %s1009, 4294901760
      %s1011 = scalar_select %p1005, 2143289344, %s1010
      %s1013 = sshrl.u32 %s1011, 16
      %s1014 = sshll.u32 %s1013, 16
      %s1015 = sor.u32 %s1013, %s1014
      %v1016 = vstv %s1015
      %v1018 = vunpack.c.l.bf16 %v1016
      %v1019 = vmul.f32 %v714, %v1018
      %v1020 = vmul.f32 %v715, %v1018
      %v1021 = vmul.f32 %v716, %v1018
      %v1022 = vmul.f32 %v717, %v1018
      %v1023 = vmul.f32 %v718, %v1018
      %v1024 = vmul.f32 %v719, %v1018
      %v1025 = vmul.f32 %v720, %v1018
      %v1026 = vmul.f32 %v721, %v1018
      %v1027 = vmul.f32 %v722, %v1018
      %v1028 = vmul.f32 %v723, %v1018
      %v1029 = vmul.f32 %v724, %v1018
      %v1030 = vmul.f32 %v725, %v1018
      %v1031 = vmul.f32 %v726, %v1018
      %v1032 = vmul.f32 %v727, %v1018
      %v1033 = vmul.f32 %v728, %v1018
      %v1034 = vmul.f32 %v729, %v1018
      %v1035 = vpack.c.bf16 %v1019, %v1019
      %v1036 = vpack.c.bf16 %v1020, %v1020
      %v1037 = vpack.c.bf16 %v1021, %v1021
      %v1038 = vpack.c.bf16 %v1022, %v1022
      %v1039 = vpack.c.bf16 %v1023, %v1023
      %v1040 = vpack.c.bf16 %v1024, %v1024
      %v1041 = vpack.c.bf16 %v1025, %v1025
      %v1042 = vpack.c.bf16 %v1026, %v1026
      %v1043 = vpack.c.bf16 %v1027, %v1027
      %v1044 = vpack.c.bf16 %v1028, %v1028
      %v1045 = vpack.c.bf16 %v1029, %v1029
      %v1046 = vpack.c.bf16 %v1030, %v1030
      %v1047 = vpack.c.bf16 %v1031, %v1031
      %v1048 = vpack.c.bf16 %v1032, %v1032
      %v1049 = vpack.c.bf16 %v1033, %v1033
      %v1050 = vpack.c.bf16 %v1034, %v1034
      %v1051 = vunpack.c.l.bf16 %v1035
      %v1052 = vunpack.c.l.bf16 %v1036
      %v1053 = vunpack.c.l.bf16 %v1037
      %v1054 = vunpack.c.l.bf16 %v1038
      %v1055 = vunpack.c.l.bf16 %v1039
      %v1056 = vunpack.c.l.bf16 %v1040
      %v1057 = vunpack.c.l.bf16 %v1041
      %v1058 = vunpack.c.l.bf16 %v1042
      %v1059 = vunpack.c.l.bf16 %v1043
      %v1060 = vunpack.c.l.bf16 %v1044
      %v1061 = vunpack.c.l.bf16 %v1045
      %v1062 = vunpack.c.l.bf16 %v1046
      %v1063 = vunpack.c.l.bf16 %v1047
      %v1064 = vunpack.c.l.bf16 %v1048
      %v1065 = vunpack.c.l.bf16 %v1049
      %v1066 = vunpack.c.l.bf16 %v1050
      %v1067 = vmul.f32 %v1051, 1.442695
      %v1068 = vpow.pop %v1067
      %v1069 = vmul.f32 %v1052, 1.442695
      %v1070 = vpow.pop %v1069
      %v1071 = vmul.f32 %v1053, 1.442695
      %v1072 = vpow.pop %v1071
      %v1073 = vmul.f32 %v1054, 1.442695
      %v1074 = vpow.pop %v1073
      %v1075 = vmul.f32 %v1055, 1.442695
      %v1076 = vpow.pop %v1075
      %v1077 = vmul.f32 %v1056, 1.442695
      %v1078 = vpow.pop %v1077
      %v1079 = vmul.f32 %v1057, 1.442695
      %v1080 = vpow.pop %v1079
      %v1081 = vmul.f32 %v1058, 1.442695
      %v1082 = vpow.pop %v1081
      %v1083 = vmul.f32 %v1059, 1.442695
      %v1084 = vpow.pop %v1083
      %v1085 = vmul.f32 %v1060, 1.442695
      %v1086 = vpow.pop %v1085
      %v1087 = vmul.f32 %v1061, 1.442695
      %v1088 = vpow.pop %v1087
      %v1089 = vmul.f32 %v1062, 1.442695
      %v1090 = vpow.pop %v1089
      %v1091 = vmul.f32 %v1063, 1.442695
      %v1092 = vpow.pop %v1091
      %v1093 = vmul.f32 %v1064, 1.442695
      %v1094 = vpow.pop %v1093
      %v1095 = vmul.f32 %v1065, 1.442695
      %v1096 = vpow.pop %v1095
      %v1097 = vmul.f32 %v1066, 1.442695
      %v1098 = vpow.pop %v1097
      %v1099 = vpack.c.bf16 %v1068, %v1068
      %v1100 = vpack.c.bf16 %v1070, %v1070
      %v1101 = vpack.c.bf16 %v1072, %v1072
      %v1102 = vpack.c.bf16 %v1074, %v1074
      %v1103 = vpack.c.bf16 %v1076, %v1076
      %v1104 = vpack.c.bf16 %v1078, %v1078
      %v1105 = vpack.c.bf16 %v1080, %v1080
      %v1106 = vpack.c.bf16 %v1082, %v1082
      %v1107 = vpack.c.bf16 %v1084, %v1084
      %v1108 = vpack.c.bf16 %v1086, %v1086
      %v1109 = vpack.c.bf16 %v1088, %v1088
      %v1110 = vpack.c.bf16 %v1090, %v1090
      %v1111 = vpack.c.bf16 %v1092, %v1092
      %v1112 = vpack.c.bf16 %v1094, %v1094
      %v1113 = vpack.c.bf16 %v1096, %v1096
      %v1114 = vpack.c.bf16 %v1098, %v1098
      %v1115 = vunpack.c.l.bf16 %v1099
      %v1116 = vunpack.c.l.bf16 %v1100
      %v1117 = vunpack.c.l.bf16 %v1101
      %v1118 = vunpack.c.l.bf16 %v1102
      %v1119 = vunpack.c.l.bf16 %v1103
      %v1120 = vunpack.c.l.bf16 %v1104
      %v1121 = vunpack.c.l.bf16 %v1105
      %v1122 = vunpack.c.l.bf16 %v1106
      %v1123 = vunpack.c.l.bf16 %v1107
      %v1124 = vunpack.c.l.bf16 %v1108
      %v1125 = vunpack.c.l.bf16 %v1109
      %v1126 = vunpack.c.l.bf16 %v1110
      %v1127 = vunpack.c.l.bf16 %v1111
      %v1128 = vunpack.c.l.bf16 %v1112
      %v1129 = vunpack.c.l.bf16 %v1113
      %v1130 = vunpack.c.l.bf16 %v1114
      %v1131 = vadd.f32 %v987, %v1115
      %v1132 = vadd.f32 %v988, %v1116
      %v1133 = vadd.f32 %v989, %v1117
      %v1134 = vadd.f32 %v990, %v1118
      %v1135 = vadd.f32 %v991, %v1119
      %v1136 = vadd.f32 %v992, %v1120
      %v1137 = vadd.f32 %v993, %v1121
      %v1138 = vadd.f32 %v994, %v1122
      %v1139 = vadd.f32 %v995, %v1123
      %v1140 = vadd.f32 %v996, %v1124
      %v1141 = vadd.f32 %v997, %v1125
      %v1142 = vadd.f32 %v998, %v1126
      %v1143 = vadd.f32 %v999, %v1127
      %v1144 = vadd.f32 %v1000, %v1128
      %v1145 = vadd.f32 %v1001, %v1129
      %v1146 = vadd.f32 %v1002, %v1130
      %s1147 = sld [smem:[#allocation6 + $0x3]]
      %p1149 = scmp.ne.f32.partialorder %s1147, %s1147
      %s1150 = sshrl.u32 %s1147, 16
      %s1151 = sand.u32 %s1150, 1
      %s1152 = sadd.s32 32767, %s1151
      %s1153 = sadd.s32 %s1147, %s1152
      %s1154 = sand.u32 %s1153, 4294901760
      %s1155 = scalar_select %p1149, 2143289344, %s1154
      %s1157 = sshrl.u32 %s1155, 16
      %s1158 = sshll.u32 %s1157, 16
      %s1159 = sor.u32 %s1157, %s1158
      %v1160 = vstv %s1159
      %v1162 = vunpack.c.l.bf16 %v1160
      %v1163 = vmul.f32 %v714, %v1162
      %v1164 = vmul.f32 %v715, %v1162
      %v1165 = vmul.f32 %v716, %v1162
      %v1166 = vmul.f32 %v717, %v1162
      %v1167 = vmul.f32 %v718, %v1162
      %v1168 = vmul.f32 %v719, %v1162
      %v1169 = vmul.f32 %v720, %v1162
      %v1170 = vmul.f32 %v721, %v1162
      %v1171 = vmul.f32 %v722, %v1162
      %v1172 = vmul.f32 %v723, %v1162
      %v1173 = vmul.f32 %v724, %v1162
      %v1174 = vmul.f32 %v725, %v1162
      %v1175 = vmul.f32 %v726, %v1162
      %v1176 = vmul.f32 %v727, %v1162
      %v1177 = vmul.f32 %v728, %v1162
      %v1178 = vmul.f32 %v729, %v1162
      %v1179 = vpack.c.bf16 %v1163, %v1163
      %v1180 = vpack.c.bf16 %v1164, %v1164
      %v1181 = vpack.c.bf16 %v1165, %v1165
      %v1182 = vpack.c.bf16 %v1166, %v1166
      %v1183 = vpack.c.bf16 %v1167, %v1167
      %v1184 = vpack.c.bf16 %v1168, %v1168
      %v1185 = vpack.c.bf16 %v1169, %v1169
      %v1186 = vpack.c.bf16 %v1170, %v1170
      %v1187 = vpack.c.bf16 %v1171, %v1171
      %v1188 = vpack.c.bf16 %v1172, %v1172
      %v1189 = vpack.c.bf16 %v1173, %v1173
      %v1190 = vpack.c.bf16 %v1174, %v1174
      %v1191 = vpack.c.bf16 %v1175, %v1175
      %v1192 = vpack.c.bf16 %v1176, %v1176
      %v1193 = vpack.c.bf16 %v1177, %v1177
      %v1194 = vpack.c.bf16 %v1178, %v1178
      %v1195 = vunpack.c.l.bf16 %v1179
      %v1196 = vunpack.c.l.bf16 %v1180
      %v1197 = vunpack.c.l.bf16 %v1181
      %v1198 = vunpack.c.l.bf16 %v1182
      %v1199 = vunpack.c.l.bf16 %v1183
      %v1200 = vunpack.c.l.bf16 %v1184
      %v1201 = vunpack.c.l.bf16 %v1185
      %v1202 = vunpack.c.l.bf16 %v1186
      %v1203 = vunpack.c.l.bf16 %v1187
      %v1204 = vunpack.c.l.bf16 %v1188
      %v1205 = vunpack.c.l.bf16 %v1189
      %v1206 = vunpack.c.l.bf16 %v1190
      %v1207 = vunpack.c.l.bf16 %v1191
      %v1208 = vunpack.c.l.bf16 %v1192
      %v1209 = vunpack.c.l.bf16 %v1193
      %v1210 = vunpack.c.l.bf16 %v1194
      %v1211 = vmul.f32 %v1195, 1.442695
      %v1212 = vpow.pop %v1211
      %v1213 = vmul.f32 %v1196, 1.442695
      %v1214 = vpow.pop %v1213
      %v1215 = vmul.f32 %v1197, 1.442695
      %v1216 = vpow.pop %v1215
      %v1217 = vmul.f32 %v1198, 1.442695
      %v1218 = vpow.pop %v1217
      %v1219 = vmul.f32 %v1199, 1.442695
      %v1220 = vpow.pop %v1219
      %v1221 = vmul.f32 %v1200, 1.442695
      %v1222 = vpow.pop %v1221
      %v1223 = vmul.f32 %v1201, 1.442695
      %v1224 = vpow.pop %v1223
      %v1225 = vmul.f32 %v1202, 1.442695
      %v1226 = vpow.pop %v1225
      %v1227 = vmul.f32 %v1203, 1.442695
      %v1228 = vpow.pop %v1227
      %v1229 = vmul.f32 %v1204, 1.442695
      %v1230 = vpow.pop %v1229
      %v1231 = vmul.f32 %v1205, 1.442695
      %v1232 = vpow.pop %v1231
      %v1233 = vmul.f32 %v1206, 1.442695
      %v1234 = vpow.pop %v1233
      %v1235 = vmul.f32 %v1207, 1.442695
      %v1236 = vpow.pop %v1235
      %v1237 = vmul.f32 %v1208, 1.442695
      %v1238 = vpow.pop %v1237
      %v1239 = vmul.f32 %v1209, 1.442695
      %v1240 = vpow.pop %v1239
      %v1241 = vmul.f32 %v1210, 1.442695
      %v1242 = vpow.pop %v1241
      %v1243 = vpack.c.bf16 %v1212, %v1212
      %v1244 = vpack.c.bf16 %v1214, %v1214
      %v1245 = vpack.c.bf16 %v1216, %v1216
      %v1246 = vpack.c.bf16 %v1218, %v1218
      %v1247 = vpack.c.bf16 %v1220, %v1220
      %v1248 = vpack.c.bf16 %v1222, %v1222
      %v1249 = vpack.c.bf16 %v1224, %v1224
      %v1250 = vpack.c.bf16 %v1226, %v1226
      %v1251 = vpack.c.bf16 %v1228, %v1228
      %v1252 = vpack.c.bf16 %v1230, %v1230
      %v1253 = vpack.c.bf16 %v1232, %v1232
      %v1254 = vpack.c.bf16 %v1234, %v1234
      %v1255 = vpack.c.bf16 %v1236, %v1236
      %v1256 = vpack.c.bf16 %v1238, %v1238
      %v1257 = vpack.c.bf16 %v1240, %v1240
      %v1258 = vpack.c.bf16 %v1242, %v1242
      %v1259 = vunpack.c.l.bf16 %v1243
      %v1260 = vunpack.c.l.bf16 %v1244
      %v1261 = vunpack.c.l.bf16 %v1245
      %v1262 = vunpack.c.l.bf16 %v1246
      %v1263 = vunpack.c.l.bf16 %v1247
      %v1264 = vunpack.c.l.bf16 %v1248
      %v1265 = vunpack.c.l.bf16 %v1249
      %v1266 = vunpack.c.l.bf16 %v1250
      %v1267 = vunpack.c.l.bf16 %v1251
      %v1268 = vunpack.c.l.bf16 %v1252
      %v1269 = vunpack.c.l.bf16 %v1253
      %v1270 = vunpack.c.l.bf16 %v1254
      %v1271 = vunpack.c.l.bf16 %v1255
      %v1272 = vunpack.c.l.bf16 %v1256
      %v1273 = vunpack.c.l.bf16 %v1257
      %v1274 = vunpack.c.l.bf16 %v1258
      %v1275 = vadd.f32 %v1131, %v1259
      %v1276 = vadd.f32 %v1132, %v1260
      %v1277 = vadd.f32 %v1133, %v1261
      %v1278 = vadd.f32 %v1134, %v1262
      %v1279 = vadd.f32 %v1135, %v1263
      %v1280 = vadd.f32 %v1136, %v1264
      %v1281 = vadd.f32 %v1137, %v1265
      %v1282 = vadd.f32 %v1138, %v1266
      %v1283 = vadd.f32 %v1139, %v1267
      %v1284 = vadd.f32 %v1140, %v1268
      %v1285 = vadd.f32 %v1141, %v1269
      %v1286 = vadd.f32 %v1142, %v1270
      %v1287 = vadd.f32 %v1143, %v1271
      %v1288 = vadd.f32 %v1144, %v1272
      %v1289 = vadd.f32 %v1145, %v1273
      %v1290 = vadd.f32 %v1146, %v1274
      %s1291 = sld [smem:[#allocation6 + $0x4]]
      %p1293 = scmp.ne.f32.partialorder %s1291, %s1291
      %s1294 = sshrl.u32 %s1291, 16
      %s1295 = sand.u32 %s1294, 1
      %s1296 = sadd.s32 32767, %s1295
      %s1297 = sadd.s32 %s1291, %s1296
      %s1298 = sand.u32 %s1297, 4294901760
      %s1299 = scalar_select %p1293, 2143289344, %s1298
      %s1301 = sshrl.u32 %s1299, 16
      %s1302 = sshll.u32 %s1301, 16
      %s1303 = sor.u32 %s1301, %s1302
      %v1304 = vstv %s1303
      %v1306 = vunpack.c.l.bf16 %v1304
      %v1307 = vmul.f32 %v714, %v1306
      %v1308 = vmul.f32 %v715, %v1306
      %v1309 = vmul.f32 %v716, %v1306
      %v1310 = vmul.f32 %v717, %v1306
      %v1311 = vmul.f32 %v718, %v1306
      %v1312 = vmul.f32 %v719, %v1306
      %v1313 = vmul.f32 %v720, %v1306
      %v1314 = vmul.f32 %v721, %v1306
      %v1315 = vmul.f32 %v722, %v1306
      %v1316 = vmul.f32 %v723, %v1306
      %v1317 = vmul.f32 %v724, %v1306
      %v1318 = vmul.f32 %v725, %v1306
      %v1319 = vmul.f32 %v726, %v1306
      %v1320 = vmul.f32 %v727, %v1306
      %v1321 = vmul.f32 %v728, %v1306
      %v1322 = vmul.f32 %v729, %v1306
      %v1323 = vpack.c.bf16 %v1307, %v1307
      %v1324 = vpack.c.bf16 %v1308, %v1308
      %v1325 = vpack.c.bf16 %v1309, %v1309
      %v1326 = vpack.c.bf16 %v1310, %v1310
      %v1327 = vpack.c.bf16 %v1311, %v1311
      %v1328 = vpack.c.bf16 %v1312, %v1312
      %v1329 = vpack.c.bf16 %v1313, %v1313
      %v1330 = vpack.c.bf16 %v1314, %v1314
      %v1331 = vpack.c.bf16 %v1315, %v1315
      %v1332 = vpack.c.bf16 %v1316, %v1316
      %v1333 = vpack.c.bf16 %v1317, %v1317
      %v1334 = vpack.c.bf16 %v1318, %v1318
      %v1335 = vpack.c.bf16 %v1319, %v1319
      %v1336 = vpack.c.bf16 %v1320, %v1320
      %v1337 = vpack.c.bf16 %v1321, %v1321
      %v1338 = vpack.c.bf16 %v1322, %v1322
      %v1339 = vunpack.c.l.bf16 %v1323
      %v1340 = vunpack.c.l.bf16 %v1324
      %v1341 = vunpack.c.l.bf16 %v1325
      %v1342 = vunpack.c.l.bf16 %v1326
      %v1343 = vunpack.c.l.bf16 %v1327
      %v1344 = vunpack.c.l.bf16 %v1328
      %v1345 = vunpack.c.l.bf16 %v1329
      %v1346 = vunpack.c.l.bf16 %v1330
      %v1347 = vunpack.c.l.bf16 %v1331
      %v1348 = vunpack.c.l.bf16 %v1332
      %v1349 = vunpack.c.l.bf16 %v1333
      %v1350 = vunpack.c.l.bf16 %v1334
      %v1351 = vunpack.c.l.bf16 %v1335
      %v1352 = vunpack.c.l.bf16 %v1336
      %v1353 = vunpack.c.l.bf16 %v1337
      %v1354 = vunpack.c.l.bf16 %v1338
      %v1355 = vmul.f32 %v1339, 1.442695
      %v1356 = vpow.pop %v1355
      %v1357 = vmul.f32 %v1340, 1.442695
      %v1358 = vpow.pop %v1357
      %v1359 = vmul.f32 %v1341, 1.442695
      %v1360 = vpow.pop %v1359
      %v1361 = vmul.f32 %v1342, 1.442695
      %v1362 = vpow.pop %v1361
      %v1363 = vmul.f32 %v1343, 1.442695
      %v1364 = vpow.pop %v1363
      %v1365 = vmul.f32 %v1344, 1.442695
      %v1366 = vpow.pop %v1365
      %v1367 = vmul.f32 %v1345, 1.442695
      %v1368 = vpow.pop %v1367
      %v1369 = vmul.f32 %v1346, 1.442695
      %v1370 = vpow.pop %v1369
      %v1371 = vmul.f32 %v1347, 1.442695
      %v1372 = vpow.pop %v1371
      %v1373 = vmul.f32 %v1348, 1.442695
      %v1374 = vpow.pop %v1373
      %v1375 = vmul.f32 %v1349, 1.442695
      %v1376 = vpow.pop %v1375
      %v1377 = vmul.f32 %v1350, 1.442695
      %v1378 = vpow.pop %v1377
      %v1379 = vmul.f32 %v1351, 1.442695
      %v1380 = vpow.pop %v1379
      %v1381 = vmul.f32 %v1352, 1.442695
      %v1382 = vpow.pop %v1381
      %v1383 = vmul.f32 %v1353, 1.442695
      %v1384 = vpow.pop %v1383
      %v1385 = vmul.f32 %v1354, 1.442695
      %v1386 = vpow.pop %v1385
      %v1387 = vpack.c.bf16 %v1356, %v1356
      %v1388 = vpack.c.bf16 %v1358, %v1358
      %v1389 = vpack.c.bf16 %v1360, %v1360
      %v1390 = vpack.c.bf16 %v1362, %v1362
      %v1391 = vpack.c.bf16 %v1364, %v1364
      %v1392 = vpack.c.bf16 %v1366, %v1366
      %v1393 = vpack.c.bf16 %v1368, %v1368
      %v1394 = vpack.c.bf16 %v1370, %v1370
      %v1395 = vpack.c.bf16 %v1372, %v1372
      %v1396 = vpack.c.bf16 %v1374, %v1374
      %v1397 = vpack.c.bf16 %v1376, %v1376
      %v1398 = vpack.c.bf16 %v1378, %v1378
      %v1399 = vpack.c.bf16 %v1380, %v1380
      %v1400 = vpack.c.bf16 %v1382, %v1382
      %v1401 = vpack.c.bf16 %v1384, %v1384
      %v1402 = vpack.c.bf16 %v1386, %v1386
      %v1403 = vunpack.c.l.bf16 %v1387
      %v1404 = vunpack.c.l.bf16 %v1388
      %v1405 = vunpack.c.l.bf16 %v1389
      %v1406 = vunpack.c.l.bf16 %v1390
      %v1407 = vunpack.c.l.bf16 %v1391
      %v1408 = vunpack.c.l.bf16 %v1392
      %v1409 = vunpack.c.l.bf16 %v1393
      %v1410 = vunpack.c.l.bf16 %v1394
      %v1411 = vunpack.c.l.bf16 %v1395
      %v1412 = vunpack.c.l.bf16 %v1396
      %v1413 = vunpack.c.l.bf16 %v1397
      %v1414 = vunpack.c.l.bf16 %v1398
      %v1415 = vunpack.c.l.bf16 %v1399
      %v1416 = vunpack.c.l.bf16 %v1400
      %v1417 = vunpack.c.l.bf16 %v1401
      %v1418 = vunpack.c.l.bf16 %v1402
      %v1419 = vadd.f32 %v1275, %v1403
      %v1420 = vadd.f32 %v1276, %v1404
      %v1421 = vadd.f32 %v1277, %v1405
      %v1422 = vadd.f32 %v1278, %v1406
      %v1423 = vadd.f32 %v1279, %v1407
      %v1424 = vadd.f32 %v1280, %v1408
      %v1425 = vadd.f32 %v1281, %v1409
      %v1426 = vadd.f32 %v1282, %v1410
      %v1427 = vadd.f32 %v1283, %v1411
      %v1428 = vadd.f32 %v1284, %v1412
      %v1429 = vadd.f32 %v1285, %v1413
      %v1430 = vadd.f32 %v1286, %v1414
      %v1431 = vadd.f32 %v1287, %v1415
      %v1432 = vadd.f32 %v1288, %v1416
      %v1433 = vadd.f32 %v1289, %v1417
      %v1434 = vadd.f32 %v1290, %v1418
      %v1435 = vld [vmem:[%s235] sm:$0xff]
      %v1436 = vld [vmem:[%s235 + $0x8] sm:$0xff]
      %v1437 = vld [vmem:[%s235 + $0x10] sm:$0xff]
      %v1438 = vld [vmem:[%s235 + $0x18] sm:$0xff]
      %v1439 = vld [vmem:[%s235 + $0x20] sm:$0xff]
      %v1440 = vld [vmem:[%s235 + $0x28] sm:$0xff]
      %v1441 = vld [vmem:[%s235 + $0x30] sm:$0xff]
      %v1442 = vld [vmem:[%s235 + $0x38] sm:$0xff]
      %v1443 = vld [vmem:[%s235 + $0x40] sm:$0xff]
      %v1444 = vld [vmem:[%s235 + $0x48] sm:$0xff]
      %v1445 = vld [vmem:[%s235 + $0x50] sm:$0xff]
      %v1446 = vld [vmem:[%s235 + $0x58] sm:$0xff]
      %v1447 = vld [vmem:[%s235 + $0x60] sm:$0xff]
      %v1448 = vld [vmem:[%s235 + $0x68] sm:$0xff]
      %v1449 = vld [vmem:[%s235 + $0x70] sm:$0xff]
      %v1450 = vld [vmem:[%s235 + $0x78] sm:$0xff]
      %1452 = vset.pattern.permute.xlu0 0
      %1453 = vperm.xlu0 %1452, %v1435
      %v1454 = vpop.permute.xlu0 %1453
      %1457 = vset.pattern.permute.xlu0 0
      %1458 = vperm.xlu0 %1457, %v1436
      %v1459 = vpop.permute.xlu0 %1458
      %1462 = vset.pattern.permute.xlu0 0
      %1463 = vperm.xlu0 %1462, %v1437
      %v1464 = vpop.permute.xlu0 %1463
      %1467 = vset.pattern.permute.xlu0 0
      %1468 = vperm.xlu0 %1467, %v1438
      %v1469 = vpop.permute.xlu0 %1468
      %1472 = vset.pattern.permute.xlu0 0
      %1473 = vperm.xlu0 %1472, %v1439
      %v1474 = vpop.permute.xlu0 %1473
      %1477 = vset.pattern.permute.xlu0 0
      %1478 = vperm.xlu0 %1477, %v1440
      %v1479 = vpop.permute.xlu0 %1478
      %1482 = vset.pattern.permute.xlu0 0
      %1483 = vperm.xlu0 %1482, %v1441
      %v1484 = vpop.permute.xlu0 %1483
      %1487 = vset.pattern.permute.xlu0 0
      %1488 = vperm.xlu0 %1487, %v1442
      %v1489 = vpop.permute.xlu0 %1488
      %1492 = vset.pattern.permute.xlu0 0
      %1493 = vperm.xlu0 %1492, %v1443
      %v1494 = vpop.permute.xlu0 %1493
      %1497 = vset.pattern.permute.xlu0 0
      %1498 = vperm.xlu0 %1497, %v1444
      %v1499 = vpop.permute.xlu0 %1498
      %1502 = vset.pattern.permute.xlu0 0
      %1503 = vperm.xlu0 %1502, %v1445
      %v1504 = vpop.permute.xlu0 %1503
      %1507 = vset.pattern.permute.xlu0 0
      %1508 = vperm.xlu0 %1507, %v1446
      %v1509 = vpop.permute.xlu0 %1508
      %1512 = vset.pattern.permute.xlu0 0
      %1513 = vperm.xlu0 %1512, %v1447
      %v1514 = vpop.permute.xlu0 %1513
      %1517 = vset.pattern.permute.xlu0 0
      %1518 = vperm.xlu0 %1517, %v1448
      %v1519 = vpop.permute.xlu0 %1518
      %1522 = vset.pattern.permute.xlu0 0
      %1523 = vperm.xlu0 %1522, %v1449
      %v1524 = vpop.permute.xlu0 %1523
      %1527 = vset.pattern.permute.xlu0 0
      %1528 = vperm.xlu0 %1527, %v1450
      %v1529 = vpop.permute.xlu0 %1528
      %v1531 = vmul.f32 %v1454, %v1419
      %v1532 = vmul.f32 %v1459, %v1420
      %v1533 = vmul.f32 %v1464, %v1421
      %v1534 = vmul.f32 %v1469, %v1422
      %v1535 = vmul.f32 %v1474, %v1423
      %v1536 = vmul.f32 %v1479, %v1424
      %v1537 = vmul.f32 %v1484, %v1425
      %v1538 = vmul.f32 %v1489, %v1426
      %v1539 = vmul.f32 %v1494, %v1427
      %v1540 = vmul.f32 %v1499, %v1428
      %v1541 = vmul.f32 %v1504, %v1429
      %v1542 = vmul.f32 %v1509, %v1430
      %v1543 = vmul.f32 %v1514, %v1431
      %v1544 = vmul.f32 %v1519, %v1432
      %v1545 = vmul.f32 %v1524, %v1433
      %v1546 = vmul.f32 %v1529, %v1434
      %v1547 = vadd.f32 %v1531, %v1532
      %v1548 = vadd.f32 %v1547, %v1533
      %v1549 = vadd.f32 %v1548, %v1534
      %v1550 = vadd.f32 %v1549, %v1535
      %v1551 = vadd.f32 %v1550, %v1536
      %v1552 = vadd.f32 %v1551, %v1537
      %v1553 = vadd.f32 %v1552, %v1538
      %v1554 = vadd.f32 %v1553, %v1539
      %v1555 = vadd.f32 %v1554, %v1540
      %v1556 = vadd.f32 %v1555, %v1541
      %v1557 = vadd.f32 %v1556, %v1542
      %v1558 = vadd.f32 %v1557, %v1543
      %v1559 = vadd.f32 %v1558, %v1544
      %v1560 = vadd.f32 %v1559, %v1545
      %v1561 = vadd.f32 %v1560, %v1546
      %v1562 = vrot.slane %v1561, 4
      %v1563 = vadd.f32 %v1561, %v1562
      %v1564 = vrot.slane %v1563, 2
      %v1565 = vadd.f32 %v1563, %v1564
      %v1566 = vrot.slane %v1565, 1
      %v1567 = vadd.f32 %v1565, %v1566
      %s1568 = scvt.s32.f32 %s261
      %v1569 = vld [vmem:[%s247] sm:$0x1]
      %v1570 = vstv %s1568
      %v1571 = vmul.f32 %v1570, %v1569
      %v1572 = vmul.f32 %v1571, %v1567
      %v1573 = vld [vmem:[#allocation9] sm:$0x1]
      %v1574 = vadd.f32 %v1573, %v1572
      %1575 = vst [vmem:[#allocation9] sm:$0x1] %v1574
    $region41: #{tpu_custom_call.1} parent=1 // pred_fallthru
      _
    // Predicated region
    $region42: #{tpu_custom_call.1} parent=1 // pred_check
      _
    $region43: #{tpu_custom_call.1} parent=1 // pred_check_branch
      %1577 = sbr.rel (0) target = $region45
    $region44: #{tpu_custom_call.1} parent=1 // pred_region
      %s1578 = sadd.s32 0, 0
      %s1579 = smul.u32 %s1578, 128
      %s1580 = sadd.s32 %s1579, 0
      %s1581 = sld [smem:[#allocation3 + %s1580]]
      %1583 = vsyncadd [#allocation7], 0
      %s1584 = scalar_lea.hbm %s10, %s1581
      %s1586 = sshll.u32 [#allocation9], 4
      %s1587 = int_to_ptr.vmem [resolvable:$true] %s1586
      %s1588 = sshll.u32 %s1584, 4
      %s1589 = int_to_ptr.hbm [resolvable:$true] %s1588
      %1591 = dma.vmem_to_hbm [thread:$0]  %s1587, 16, %s1589, [#allocation7]
    $region45: #{tpu_custom_call.1} parent=1 // pred_fallthru
      _
    // Predicated region
    $region46: #{tpu_custom_call.1} parent=1 // pred_check
      _
    $region47: #{tpu_custom_call.1} parent=1 // pred_check_branch
      %1593 = sbr.rel (0) target = $region49
    $region48: #{tpu_custom_call.1} parent=1 // pred_region
      %1595 = dma.done [#allocation7], 16
    $region49: #{tpu_custom_call.1} parent=1 // pred_fallthru
      _
    %1596 = vsyncpa [#allocation7], 1
    %1597 = vsyncpa [#allocation8], 1

</llo_original>
